<compile_context>
chip_gen: v6e
topology: v6e:2x2x1
jax: 0.10.0
libtpu: 0.0.40
codegen_flags: <defaults>
</compile_context>

<pallas_src>
import functools

import jax
import jax.numpy as jnp
from jax import lax
from jax.experimental import pallas as pl
from jax.experimental.pallas import tpu as pltpu


def _round_up(x, m):
    return (x + m - 1) // m * m


# ---------------------------------------------------------------------------
# Pallas kernel: residual quantization over a tile of TN tokens.
# ---------------------------------------------------------------------------
def _rq_kernel(ze_ref, cb_ref, cbsq_ref, zq_ref, enc_ref, loss_ref, *,
               num_quant, n_valid, bf16_scores):
    pid = pl.program_id(0)

    z_e0 = ze_ref[...].astype(jnp.float32)                  # (TN, C) first_z_e
    tn, _ = z_e0.shape
    k = cb_ref.shape[1]

    # Validity mask for zero-padded token rows (loss only).
    row_ids = pid * tn + lax.broadcasted_iota(jnp.int32, (tn, 1), 0)
    valid = row_ids < n_valid                                # (TN, 1) bool

    lane_iota = lax.broadcasted_iota(jnp.int32, (tn, k), 1)
    nt_dims = (((1,), (1,)), ((), ()))                       # NT contraction

    z_e = z_e0                                               # running residual
    loss_vec = jnp.zeros((tn, 1), jnp.float32)               # sum_i r_i^2 per row
    enc_cols = []

    for i in range(num_quant):
        cb = cb_ref[i].astype(jnp.float32)                   # (K, C)
        cb_sq = cbsq_ref[pl.ds(i, 1), :].astype(jnp.float32)  # (1, K) hoisted

        # Squared-distance argmin; the per-row ||z_e||^2 term is constant per
        # row so it cannot change the argmin and is dropped.  dot_general
        # expresses z_e @ cb^T directly (no explicit XLU transpose of cb).
        if bf16_scores:
            dots = lax.dot_general(z_e.astype(jnp.bfloat16),
                                   cb.astype(jnp.bfloat16),
                                   dimension_numbers=nt_dims,
                                   preferred_element_type=jnp.float32)
        else:
            dots = lax.dot_general(z_e, cb, dimension_numbers=nt_dims,
                                   preferred_element_type=jnp.float32)
        score = cb_sq - 2.0 * dots                           # (TN, K)
        smin = jnp.min(score, axis=-1, keepdims=True)
        enc = jnp.min(jnp.where(score <= smin, lane_iota, k),
                      axis=-1, keepdims=True)                # (TN, 1) first idx
        enc_cols.append(enc)

        # Codebook lookup via one-hot matmul (MXU-friendly gather).
        onehot = (lane_iota == enc).astype(jnp.float32)      # (TN, K)
        z_q = jnp.dot(onehot, cb, preferred_element_type=jnp.float32)

        # r == z_e - z_q == first_z_e - z_d, so all three MSE terms reduce to
        # sum(r*r); accumulated as a (TN,1) vector, reduced once after loop.
        r = z_e - z_q
        loss_vec = loss_vec + jnp.sum(r * r, axis=-1, keepdims=True)
        z_e = r

    # sum over quantizers of z_q  ==  first_z_e - final residual.
    zq_ref[...] = (z_e0 - z_e).astype(zq_ref.dtype)
    enc_ref[...] = jnp.concatenate(enc_cols, axis=1)         # (TN, Q)

    # Single masked reduction -> per-tile loss partial (lane-dense slab).
    loss_sum = jnp.sum(jnp.where(valid, loss_vec, 0.0))
    loss_ref[...] = jnp.full(loss_ref.shape, loss_sum, dtype=jnp.float32)


# ---------------------------------------------------------------------------
# Pure-JAX reference (mirrors the PyTorch quantize() forward semantics).
# Also used as the small-N fallback path.
# ---------------------------------------------------------------------------
def rqvae_quantize_ref(z_e, codebooks):
    B, W, C = z_e.shape
    Q = codebooks.shape[0]
    z = z_e.reshape(B * W, C).astype(jnp.float32)
    first = z
    z_d = jnp.zeros_like(z)
    zq_sum = jnp.zeros_like(z)
    q = e = rq = jnp.float32(0.0)
    encs = []
    for i in range(Q):
        cb = codebooks[i].astype(jnp.float32)
        d2 = jnp.sum((z[:, None, :] - cb[None, :, :]) ** 2, axis=-1)
        idx = jnp.argmin(d2, axis=-1)
        encs.append(idx.astype(jnp.int32))
        z_q = cb[idx]
        z_d = z_d + z_q
        q += jnp.mean((z - z_q) ** 2)
        e += jnp.mean((z - z_q) ** 2)
        rq += jnp.mean((first - z_d) ** 2)
        zq_sum = zq_sum + z_q
        z = z - z_q
    comm = 0.75 * q + e + rq
    # PyTorch stacks encodings quantizer-major: (Q, B*W).
    return zq_sum.reshape(B, W, C), jnp.stack(encs, axis=0), comm


# ---------------------------------------------------------------------------
# Wrapper: RQVAE.forward quantization path.
# ---------------------------------------------------------------------------
def rqvae_quantize_forward(z_e, codebooks, *, tile_n=2048, bf16_scores=False,
                           min_pallas_tokens=4096):
    """z_e: (B, W, C) float32, codebooks: (Q, K, C) float32.

    Returns (final_z_q (B, W, C), encodings (Q, B*W), commitment_loss scalar).
    """
    B, W, C = z_e.shape
    Q, K, _ = codebooks.shape
    N = B * W

    # Size gate: a handful of tokens is pure pallas_call launch overhead;
    # let XLA handle it (pass min_pallas_tokens=0 to force the kernel).
    if N < min_pallas_tokens:
        return rqvae_quantize_ref(z_e, codebooks)

    # Token tile: large (amortizes ~0.35us/step and feeds the MXU), clamped
    # for small inputs, multiple of 8 sublanes, and capped so the parallel
    # grid keeps >= 2 steps whenever possible (v7x megacore).
    tn = min(_round_up(tile_n, 8), _round_up(N, 8))
    if N > 8:
        tn = min(tn, _round_up((N + 1) // 2, 8))
    tn = max(8, tn)
    n_pad = _round_up(N, tn)
    num_tiles = n_pad // tn

    z_flat = z_e.reshape(N, C).astype(jnp.float32)
    if n_pad != N:
        z_flat = jnp.pad(z_flat, ((0, n_pad - N), (0, 0)))

    codebooks_f32 = codebooks.astype(jnp.float32)
    # Hoisted codebook squared norms (constant across the whole grid).
    cb_sq = jnp.sum(codebooks_f32 * codebooks_f32, axis=-1)  # (Q, K)

    kernel = functools.partial(_rq_kernel, num_quant=Q, n_valid=N,
                               bf16_scores=bf16_scores)

    def _call(cb_buffers):
        if cb_buffers == 1:
            # Grid-invariant inputs: a single VMEM buffer is enough.
            cb_spec = pl.BlockSpec((Q, K, C), lambda i: (0, 0, 0),
                                   pipeline_mode=pl.Buffered(1))
            cbsq_spec = pl.BlockSpec((Q, K), lambda i: (0, 0),
                                     pipeline_mode=pl.Buffered(1))
        else:
            cb_spec = pl.BlockSpec((Q, K, C), lambda i: (0, 0, 0))
            cbsq_spec = pl.BlockSpec((Q, K), lambda i: (0, 0))

        # Explicit scoped-VMEM budget: pipeline buffers + codebook + the
        # (TN, K) score/one-hot intermediates, with headroom; capped below
        # v7x's 64 MiB physical per-TC VMEM.
        f32b = 4
        est = (2 * tn * C * f32b            # z_e in (double-buffered)
               + 2 * tn * C * f32b          # z_q out
               + 2 * tn * Q * f32b          # encodings out
               + 2 * 8 * 128 * f32b         # loss slab
               + cb_buffers * Q * K * (C + 1) * f32b   # codebook(+norms)
               + 3 * tn * K * f32b)         # score / one-hot intermediates
        vmem_limit = int(min(48 * 2**20, max(16 * 2**20, 2 * est)))

        return pl.pallas_call(
            kernel,
            out_shape=(
                jax.ShapeDtypeStruct((n_pad, C), jnp.float32),
                jax.ShapeDtypeStruct((n_pad, Q), jnp.int32),
                jax.ShapeDtypeStruct((num_tiles, 8, 128), jnp.float32),
            ),
            grid_spec=pltpu.PrefetchScalarGridSpec(
                num_scalar_prefetch=0,
                grid=(num_tiles,),
                in_specs=[
                    pl.BlockSpec((tn, C), lambda i: (i, 0)),
                    cb_spec,
                    cbsq_spec,
                ],
                out_specs=[
                    pl.BlockSpec((tn, C), lambda i: (i, 0)),
                    pl.BlockSpec((tn, Q), lambda i: (i, 0)),
                    pl.BlockSpec((1, 8, 128), lambda i: (i, 0, 0)),
                ],
            ),
            compiler_params=pltpu.CompilerParams(
                dimension_semantics=("parallel",),
                vmem_limit_bytes=vmem_limit),
        )(z_flat, codebooks_f32, cb_sq)

    try:
        zq_flat, enc_nq, loss_part = _call(cb_buffers=1)
    except Exception:
        # Fallback for JAX/Mosaic versions that reject single-buffered
        # (Buffered(1)) pipeline operands; correctness is identical.
        zq_flat, enc_nq, loss_part = _call(cb_buffers=2)

    # F.mse_loss is a mean over (N*C); q_latent == e_latent == rq_latent in
    # the forward pass, so commitment = (0.75 + 1 + 1) * sum_i mse_i.
    denom = jnp.float32(N * C)
    residual_sq_sum = jnp.sum(loss_part[:, 0, 0])
    commitment_loss = 2.75 * residual_sq_sum / denom

    # rearrange('(b l) c -> b l c'); encodings quantizer-major like torch.stack.
    final_z_q = zq_flat[:N].reshape(B, W, C)
    encodings = jnp.transpose(enc_nq[:N], (1, 0))            # (Q, N)
    return final_z_q, encodings, commitment_loss


if __name__ == "__main__":
    # Small, deterministic configuration consistent with the module:
    #   batch B=2, emb_sample_len W=8, latent_dim C=32,
    #   codebook_length K=64, num_quantizers Q=4, shared_codebook=False.
    B, W, C = 2, 8, 32
    K, Q = 64, 4

    key = jax.random.PRNGKey(0)
    k_ze, k_cb = jax.random.split(key)

    z_e = jax.random.normal(k_ze, (B, W, C), dtype=jnp.float32)

    # nn.Embedding weights with xavier_normal_: std = sqrt(2 / (K + C))
    xavier_std = (2.0 / (K + C)) ** 0.5
    codebooks = xavier_std * jax.random.normal(k_cb, (Q, K, C), dtype=jnp.float32)

    # Force the Pallas path even at this toy size (the default gate would
    # route 16 tokens to plain JAX).
    final_z_q, encodings, comm_loss = rqvae_quantize_forward(
        z_e, codebooks, min_pallas_tokens=0)
    jax.block_until_ready((final_z_q, encodings, comm_loss))

    # Correctness check against pure-JAX reference.
    ref_zq, ref_enc, ref_comm = rqvae_quantize_ref(z_e, codebooks)
    assert jnp.allclose(final_z_q, ref_zq, atol=1e-4, rtol=1e-4)
    assert jnp.all(encodings == ref_enc)
    assert jnp.allclose(comm_loss, ref_comm, atol=1e-4, rtol=1e-5)

    print("KERNEL_OK")
</pallas_src>

<mosaic_0001>
module attributes {stable_mosaic.version = 11 : i64} {
  func.func @_rq_kernel(%arg0: i32, %arg1: memref<8x32xf32, #tpu.memory_space<vmem>>, %arg2: memref<4x64x32xf32, #tpu.memory_space<vmem>>, %arg3: memref<4x64xf32, #tpu.memory_space<vmem>>, %arg4: memref<8x32xf32, #tpu.memory_space<vmem>>, %arg5: memref<8x4xi32, #tpu.memory_space<vmem>>, %arg6: memref<1x8x128xf32, #tpu.memory_space<vmem>>) attributes {dimension_semantics = [#tpu.dimension_semantics<parallel>], iteration_bounds = array<i64: 2>, scalar_prefetch = 0 : i64, scratch_operands = 0 : i64, tpu.core_type = #tpu.core_type<tc>, window_params = [{transform_indices = @transform_0, window_bounds = array<i64: 8, 32>}, {pipeline_mode = #tpu.pipeline_mode<synchronous>, transform_indices = @transform_1, window_bounds = array<i64: 4, 64, 32>}, {pipeline_mode = #tpu.pipeline_mode<synchronous>, transform_indices = @transform_2, window_bounds = array<i64: 4, 64>}, {transform_indices = @transform_3, window_bounds = array<i64: 8, 32>}, {transform_indices = @transform_4, window_bounds = array<i64: 8, 4>}, {transform_indices = @transform_5, window_bounds = array<i64: 1, 8, 128>}]} {
    %c0 = arith.constant 0 : index
    %c0_0 = arith.constant 0 : index
    %0 = vector.load %arg1[%c0, %c0_0] : memref<8x32xf32, #tpu.memory_space<vmem>>, vector<8x32xf32>
    %c8_i32 = arith.constant 8 : i32
    %1 = arith.muli %arg0, %c8_i32 : i32
    %2 = tpu.iota {dimensions = array<i32: 0>} : vector<8x1xi32>
    %3 = vector.broadcast %1 : i32 to vector<8x1xi32>
    %4 = arith.addi %3, %2 : vector<8x1xi32>
    %c16_i32 = arith.constant 16 : i32
    %5 = vector.broadcast %c16_i32 : i32 to vector<8x1xi32>
    %6 = arith.cmpi slt, %4, %5 : vector<8x1xi32>
    %7 = tpu.iota {dimensions = array<i32: 1>} : vector<8x64xi32>
    %cst = arith.constant 0.000000e+00 : f32
    %8 = vector.broadcast %cst : f32 to vector<8x1xf32>
    %c0_1 = arith.constant 0 : index
    %c0_2 = arith.constant 0 : index
    %c0_3 = arith.constant 0 : index
    %9 = vector.load %arg2[%c0_1, %c0_2, %c0_3] : memref<4x64x32xf32, #tpu.memory_space<vmem>>, vector<1x64x32xf32>
    %10 = vector.shape_cast %9 : vector<1x64x32xf32> to vector<64x32xf32>
    %c0_4 = arith.constant 0 : index
    %c0_5 = arith.constant 0 : index
    %11 = vector.load %arg3[%c0_4, %c0_5] : memref<4x64xf32, #tpu.memory_space<vmem>>, vector<1x64xf32>
    %cst_6 = arith.constant dense<0.000000e+00> : vector<8x64xf32>
    %12 = tpu.matmul %0, %10, %cst_6 {dimension_numbers = #tpu.dot_dimension_numbers<[1], [1], [0], [0], [0, 0, 1, 0], [], []>} : vector<8x32xf32>, vector<64x32xf32>, vector<8x64xf32> -> vector<8x64xf32>
    %cst_7 = arith.constant 2.000000e+00 : f32
    %13 = vector.broadcast %cst_7 : f32 to vector<8x64xf32>
    %14 = arith.mulf %13, %12 : vector<8x64xf32>
    %15 = vector.broadcast %11 : vector<1x64xf32> to vector<8x64xf32>
    %16 = arith.subf %15, %14 : vector<8x64xf32>
    %cst_8 = arith.constant dense<0x7F800000> : vector<8xf32>
    %17 = vector.multi_reduction <minimumf>, %16, %cst_8 [1] : vector<8x64xf32> to vector<8xf32>
    %18 = vector.shape_cast %17 : vector<8xf32> to vector<8x1xf32>
    %19 = vector.broadcast %18 : vector<8x1xf32> to vector<8x64xf32>
    %20 = arith.cmpf ole, %16, %19 : vector<8x64xf32>
    %c64_i32 = arith.constant 64 : i32
    %21 = vector.broadcast %c64_i32 : i32 to vector<8x64xi32>
    %22 = arith.select %20, %7, %21 : vector<8x64xi1>, vector<8x64xi32>
    %cst_9 = arith.constant dense<2147483647> : vector<8xi32>
    %23 = vector.multi_reduction <minsi>, %22, %cst_9 [1] : vector<8x64xi32> to vector<8xi32>
    %24 = vector.shape_cast %23 : vector<8xi32> to vector<8x1xi32>
    %25 = vector.broadcast %24 : vector<8x1xi32> to vector<8x64xi32>
    %26 = arith.cmpi eq, %7, %25 : vector<8x64xi32>
    %27 = arith.extui %26 : vector<8x64xi1> to vector<8x64xi32>
    %28 = arith.sitofp %27 : vector<8x64xi32> to vector<8x64xf32>
    %cst_10 = arith.constant dense<0.000000e+00> : vector<8x32xf32>
    %29 = tpu.matmul %28, %10, %cst_10 {dimension_numbers = #tpu.dot_dimension_numbers<[1], [0], [0], [1], [0, 0, 1, 1], [], []>} : vector<8x64xf32>, vector<64x32xf32>, vector<8x32xf32> -> vector<8x32xf32>
    %30 = arith.subf %0, %29 : vector<8x32xf32>
    %31 = arith.mulf %30, %30 : vector<8x32xf32>
    %cst_11 = arith.constant dense<0.000000e+00> : vector<8xf32>
    %32 = vector.multi_reduction <add>, %31, %cst_11 [1] : vector<8x32xf32> to vector<8xf32>
    %33 = vector.shape_cast %32 : vector<8xf32> to vector<8x1xf32>
    %34 = arith.addf %8, %33 : vector<8x1xf32>
    %c1 = arith.constant 1 : index
    %c0_12 = arith.constant 0 : index
    %c0_13 = arith.constant 0 : index
    %35 = vector.load %arg2[%c1, %c0_12, %c0_13] : memref<4x64x32xf32, #tpu.memory_space<vmem>>, vector<1x64x32xf32>
    %36 = vector.shape_cast %35 : vector<1x64x32xf32> to vector<64x32xf32>
    %c1_14 = arith.constant 1 : index
    %c0_15 = arith.constant 0 : index
    %37 = vector.load %arg3[%c1_14, %c0_15] : memref<4x64xf32, #tpu.memory_space<vmem>>, vector<1x64xf32>
    %cst_16 = arith.constant dense<0.000000e+00> : vector<8x64xf32>
    %38 = tpu.matmul %30, %36, %cst_16 {dimension_numbers = #tpu.dot_dimension_numbers<[1], [1], [0], [0], [0, 0, 1, 0], [], []>} : vector<8x32xf32>, vector<64x32xf32>, vector<8x64xf32> -> vector<8x64xf32>
    %cst_17 = arith.constant 2.000000e+00 : f32
    %39 = vector.broadcast %cst_17 : f32 to vector<8x64xf32>
    %40 = arith.mulf %39, %38 : vector<8x64xf32>
    %41 = vector.broadcast %37 : vector<1x64xf32> to vector<8x64xf32>
    %42 = arith.subf %41, %40 : vector<8x64xf32>
    %cst_18 = arith.constant dense<0x7F800000> : vector<8xf32>
    %43 = vector.multi_reduction <minimumf>, %42, %cst_18 [1] : vector<8x64xf32> to vector<8xf32>
    %44 = vector.shape_cast %43 : vector<8xf32> to vector<8x1xf32>
    %45 = vector.broadcast %44 : vector<8x1xf32> to vector<8x64xf32>
    %46 = arith.cmpf ole, %42, %45 : vector<8x64xf32>
    %c64_i32_19 = arith.constant 64 : i32
    %47 = vector.broadcast %c64_i32_19 : i32 to vector<8x64xi32>
    %48 = arith.select %46, %7, %47 : vector<8x64xi1>, vector<8x64xi32>
    %cst_20 = arith.constant dense<2147483647> : vector<8xi32>
    %49 = vector.multi_reduction <minsi>, %48, %cst_20 [1] : vector<8x64xi32> to vector<8xi32>
    %50 = vector.shape_cast %49 : vector<8xi32> to vector<8x1xi32>
    %51 = vector.broadcast %50 : vector<8x1xi32> to vector<8x64xi32>
    %52 = arith.cmpi eq, %7, %51 : vector<8x64xi32>
    %53 = arith.extui %52 : vector<8x64xi1> to vector<8x64xi32>
    %54 = arith.sitofp %53 : vector<8x64xi32> to vector<8x64xf32>
    %cst_21 = arith.constant dense<0.000000e+00> : vector<8x32xf32>
    %55 = tpu.matmul %54, %36, %cst_21 {dimension_numbers = #tpu.dot_dimension_numbers<[1], [0], [0], [1], [0, 0, 1, 1], [], []>} : vector<8x64xf32>, vector<64x32xf32>, vector<8x32xf32> -> vector<8x32xf32>
    %56 = arith.subf %30, %55 : vector<8x32xf32>
    %57 = arith.mulf %56, %56 : vector<8x32xf32>
    %cst_22 = arith.constant dense<0.000000e+00> : vector<8xf32>
    %58 = vector.multi_reduction <add>, %57, %cst_22 [1] : vector<8x32xf32> to vector<8xf32>
    %59 = vector.shape_cast %58 : vector<8xf32> to vector<8x1xf32>
    %60 = arith.addf %34, %59 : vector<8x1xf32>
    %c2 = arith.constant 2 : index
    %c0_23 = arith.constant 0 : index
    %c0_24 = arith.constant 0 : index
    %61 = vector.load %arg2[%c2, %c0_23, %c0_24] : memref<4x64x32xf32, #tpu.memory_space<vmem>>, vector<1x64x32xf32>
    %62 = vector.shape_cast %61 : vector<1x64x32xf32> to vector<64x32xf32>
    %c2_25 = arith.constant 2 : index
    %c0_26 = arith.constant 0 : index
    %63 = vector.load %arg3[%c2_25, %c0_26] : memref<4x64xf32, #tpu.memory_space<vmem>>, vector<1x64xf32>
    %cst_27 = arith.constant dense<0.000000e+00> : vector<8x64xf32>
    %64 = tpu.matmul %56, %62, %cst_27 {dimension_numbers = #tpu.dot_dimension_numbers<[1], [1], [0], [0], [0, 0, 1, 0], [], []>} : vector<8x32xf32>, vector<64x32xf32>, vector<8x64xf32> -> vector<8x64xf32>
    %cst_28 = arith.constant 2.000000e+00 : f32
    %65 = vector.broadcast %cst_28 : f32 to vector<8x64xf32>
    %66 = arith.mulf %65, %64 : vector<8x64xf32>
    %67 = vector.broadcast %63 : vector<1x64xf32> to vector<8x64xf32>
    %68 = arith.subf %67, %66 : vector<8x64xf32>
    %cst_29 = arith.constant dense<0x7F800000> : vector<8xf32>
    %69 = vector.multi_reduction <minimumf>, %68, %cst_29 [1] : vector<8x64xf32> to vector<8xf32>
    %70 = vector.shape_cast %69 : vector<8xf32> to vector<8x1xf32>
    %71 = vector.broadcast %70 : vector<8x1xf32> to vector<8x64xf32>
    %72 = arith.cmpf ole, %68, %71 : vector<8x64xf32>
    %c64_i32_30 = arith.constant 64 : i32
    %73 = vector.broadcast %c64_i32_30 : i32 to vector<8x64xi32>
    %74 = arith.select %72, %7, %73 : vector<8x64xi1>, vector<8x64xi32>
    %cst_31 = arith.constant dense<2147483647> : vector<8xi32>
    %75 = vector.multi_reduction <minsi>, %74, %cst_31 [1] : vector<8x64xi32> to vector<8xi32>
    %76 = vector.shape_cast %75 : vector<8xi32> to vector<8x1xi32>
    %77 = vector.broadcast %76 : vector<8x1xi32> to vector<8x64xi32>
    %78 = arith.cmpi eq, %7, %77 : vector<8x64xi32>
    %79 = arith.extui %78 : vector<8x64xi1> to vector<8x64xi32>
    %80 = arith.sitofp %79 : vector<8x64xi32> to vector<8x64xf32>
    %cst_32 = arith.constant dense<0.000000e+00> : vector<8x32xf32>
    %81 = tpu.matmul %80, %62, %cst_32 {dimension_numbers = #tpu.dot_dimension_numbers<[1], [0], [0], [1], [0, 0, 1, 1], [], []>} : vector<8x64xf32>, vector<64x32xf32>, vector<8x32xf32> -> vector<8x32xf32>
    %82 = arith.subf %56, %81 : vector<8x32xf32>
    %83 = arith.mulf %82, %82 : vector<8x32xf32>
    %cst_33 = arith.constant dense<0.000000e+00> : vector<8xf32>
    %84 = vector.multi_reduction <add>, %83, %cst_33 [1] : vector<8x32xf32> to vector<8xf32>
    %85 = vector.shape_cast %84 : vector<8xf32> to vector<8x1xf32>
    %86 = arith.addf %60, %85 : vector<8x1xf32>
    %c3 = arith.constant 3 : index
    %c0_34 = arith.constant 0 : index
    %c0_35 = arith.constant 0 : index
    %87 = vector.load %arg2[%c3, %c0_34, %c0_35] : memref<4x64x32xf32, #tpu.memory_space<vmem>>, vector<1x64x32xf32>
    %88 = vector.shape_cast %87 : vector<1x64x32xf32> to vector<64x32xf32>
    %c3_36 = arith.constant 3 : index
    %c0_37 = arith.constant 0 : index
    %89 = vector.load %arg3[%c3_36, %c0_37] : memref<4x64xf32, #tpu.memory_space<vmem>>, vector<1x64xf32>
    %cst_38 = arith.constant dense<0.000000e+00> : vector<8x64xf32>
    %90 = tpu.matmul %82, %88, %cst_38 {dimension_numbers = #tpu.dot_dimension_numbers<[1], [1], [0], [0], [0, 0, 1, 0], [], []>} : vector<8x32xf32>, vector<64x32xf32>, vector<8x64xf32> -> vector<8x64xf32>
    %cst_39 = arith.constant 2.000000e+00 : f32
    %91 = vector.broadcast %cst_39 : f32 to vector<8x64xf32>
    %92 = arith.mulf %91, %90 : vector<8x64xf32>
    %93 = vector.broadcast %89 : vector<1x64xf32> to vector<8x64xf32>
    %94 = arith.subf %93, %92 : vector<8x64xf32>
    %cst_40 = arith.constant dense<0x7F800000> : vector<8xf32>
    %95 = vector.multi_reduction <minimumf>, %94, %cst_40 [1] : vector<8x64xf32> to vector<8xf32>
    %96 = vector.shape_cast %95 : vector<8xf32> to vector<8x1xf32>
    %97 = vector.broadcast %96 : vector<8x1xf32> to vector<8x64xf32>
    %98 = arith.cmpf ole, %94, %97 : vector<8x64xf32>
    %c64_i32_41 = arith.constant 64 : i32
    %99 = vector.broadcast %c64_i32_41 : i32 to vector<8x64xi32>
    %100 = arith.select %98, %7, %99 : vector<8x64xi1>, vector<8x64xi32>
    %cst_42 = arith.constant dense<2147483647> : vector<8xi32>
    %101 = vector.multi_reduction <minsi>, %100, %cst_42 [1] : vector<8x64xi32> to vector<8xi32>
    %102 = vector.shape_cast %101 : vector<8xi32> to vector<8x1xi32>
    %103 = vector.broadcast %102 : vector<8x1xi32> to vector<8x64xi32>
    %104 = arith.cmpi eq, %7, %103 : vector<8x64xi32>
    %105 = arith.extui %104 : vector<8x64xi1> to vector<8x64xi32>
    %106 = arith.sitofp %105 : vector<8x64xi32> to vector<8x64xf32>
    %cst_43 = arith.constant dense<0.000000e+00> : vector<8x32xf32>
    %107 = tpu.matmul %106, %88, %cst_43 {dimension_numbers = #tpu.dot_dimension_numbers<[1], [0], [0], [1], [0, 0, 1, 1], [], []>} : vector<8x64xf32>, vector<64x32xf32>, vector<8x32xf32> -> vector<8x32xf32>
    %108 = arith.subf %82, %107 : vector<8x32xf32>
    %109 = arith.mulf %108, %108 : vector<8x32xf32>
    %cst_44 = arith.constant dense<0.000000e+00> : vector<8xf32>
    %110 = vector.multi_reduction <add>, %109, %cst_44 [1] : vector<8x32xf32> to vector<8xf32>
    %111 = vector.shape_cast %110 : vector<8xf32> to vector<8x1xf32>
    %112 = arith.addf %86, %111 : vector<8x1xf32>
    %113 = arith.subf %0, %108 : vector<8x32xf32>
    %c0_45 = arith.constant 0 : index
    %c0_46 = arith.constant 0 : index
    %114 = vector.load %arg4[%c0_45, %c0_46] : memref<8x32xf32, #tpu.memory_space<vmem>>, vector<8x32xf32>
    tpu.vector_store %arg4[%c0_45, %c0_46], %113 {strides = array<i32>} : memref<8x32xf32, #tpu.memory_space<vmem>>, vector<8x32xf32>,
    %115 = tpu.concatenate %24, %50, %76, %102 in 1 : vector<8x1xi32>, vector<8x1xi32>, vector<8x1xi32>, vector<8x1xi32> -> vector<8x4xi32>
    %c0_47 = arith.constant 0 : index
    %c0_48 = arith.constant 0 : index
    %116 = vector.load %arg5[%c0_47, %c0_48] : memref<8x4xi32, #tpu.memory_space<vmem>>, vector<8x4xi32>
    tpu.vector_store %arg5[%c0_47, %c0_48], %115 {strides = array<i32>} : memref<8x4xi32, #tpu.memory_space<vmem>>, vector<8x4xi32>,
    %cst_49 = arith.constant 0.000000e+00 : f32
    %117 = vector.broadcast %cst_49 : f32 to vector<8x1xf32>
    %118 = arith.select %6, %112, %117 : vector<8x1xi1>, vector<8x1xf32>
    %119 = vector.shape_cast %118 : vector<8x1xf32> to vector<1x8x1xf32>
    %cst_50 = arith.constant dense<0.000000e+00> : vector<1xf32>
    %120 = vector.multi_reduction <add>, %119, %cst_50 [1, 2] : vector<1x8x1xf32> to vector<1xf32>
    %121 = vector.shape_cast %120 : vector<1xf32> to vector<1x1x1xf32>
    %122 = vector.extract %121[0, 0, 0] : f32 from vector<1x1x1xf32>
    %123 = vector.broadcast %122 : f32 to vector<1x8x128xf32>
    %c0_51 = arith.constant 0 : index
    %c0_52 = arith.constant 0 : index
    %c0_53 = arith.constant 0 : index
    %124 = vector.load %arg6[%c0_51, %c0_52, %c0_53] : memref<1x8x128xf32, #tpu.memory_space<vmem>>, vector<1x8x128xf32>
    tpu.vector_store %arg6[%c0_51, %c0_52, %c0_53], %123 {strides = array<i32>} : memref<1x8x128xf32, #tpu.memory_space<vmem>>, vector<1x8x128xf32>,
    return
  }
  func.func @transform_0(%arg0: i32) -> (i32, i32) {
    %c0_i32 = arith.constant 0 : i32
    %c0_i32_0 = arith.constant 0 : i32
    return %arg0, %c0_i32 : i32, i32
  }
  func.func @transform_1(%arg0: i32) -> (i32, i32, i32) {
    %c0_i32 = arith.constant 0 : i32
    %c0_i32_0 = arith.constant 0 : i32
    %c0_i32_1 = arith.constant 0 : i32
    %c0_i32_2 = arith.constant 0 : i32
    return %c0_i32, %c0_i32_0, %c0_i32_1 : i32, i32, i32
  }
  func.func @transform_2(%arg0: i32) -> (i32, i32) {
    %c0_i32 = arith.constant 0 : i32
    %c0_i32_0 = arith.constant 0 : i32
    %c0_i32_1 = arith.constant 0 : i32
    return %c0_i32, %c0_i32_0 : i32, i32
  }
  func.func @transform_3(%arg0: i32) -> (i32, i32) {
    %c0_i32 = arith.constant 0 : i32
    %c0_i32_0 = arith.constant 0 : i32
    return %arg0, %c0_i32 : i32, i32
  }
  func.func @transform_4(%arg0: i32) -> (i32, i32) {
    %c0_i32 = arith.constant 0 : i32
    %c0_i32_0 = arith.constant 0 : i32
    return %arg0, %c0_i32 : i32, i32
  }
  func.func @transform_5(%arg0: i32) -> (i32, i32, i32) {
    %c0_i32 = arith.constant 0 : i32
    %c0_i32_0 = arith.constant 0 : i32
    %c0_i32_1 = arith.constant 0 : i32
    return %arg0, %c0_i32, %c0_i32_0 : i32, i32, i32
  }
}

module attributes {stable_mosaic.version = 11 : i64} {
  func.func @_rq_kernel(%arg0: i32, %arg1: memref<8x32xf32, #tpu.memory_space<vmem>>, %arg2: memref<4x64x32xf32, #tpu.memory_space<vmem>>, %arg3: memref<4x64xf32, #tpu.memory_space<vmem>>, %arg4: memref<8x32xf32, #tpu.memory_space<vmem>>, %arg5: memref<8x4xi32, #tpu.memory_space<vmem>>, %arg6: memref<1x8x128xf32, #tpu.memory_space<vmem>>) attributes {dimension_semantics = [#tpu.dimension_semantics<parallel>], iteration_bounds = array<i64: 2>, scalar_prefetch = 0 : i64, scratch_operands = 0 : i64, tpu.core_type = #tpu.core_type<tc>, window_params = [{transform_indices = @transform_0, window_bounds = array<i64: 8, 32>}, {pipeline_mode = #tpu.pipeline_mode<synchronous>, transform_indices = @transform_1, window_bounds = array<i64: 4, 64, 32>}, {pipeline_mode = #tpu.pipeline_mode<synchronous>, transform_indices = @transform_2, window_bounds = array<i64: 4, 64>}, {transform_indices = @transform_3, window_bounds = array<i64: 8, 32>}, {transform_indices = @transform_4, window_bounds = array<i64: 8, 4>}, {transform_indices = @transform_5, window_bounds = array<i64: 1, 8, 128>}]} {
    %c0 = arith.constant 0 : index
    %c0_0 = arith.constant 0 : index
    %0 = vector.load %arg1[%c0, %c0_0] : memref<8x32xf32, #tpu.memory_space<vmem>>, vector<8x32xf32>
    %c8_i32 = arith.constant 8 : i32
    %1 = arith.muli %arg0, %c8_i32 : i32
    %2 = tpu.iota {dimensions = array<i32: 0>} : vector<8x1xi32>
    %3 = vector.broadcast %1 : i32 to vector<8x1xi32>
    %4 = arith.addi %3, %2 : vector<8x1xi32>
    %c16_i32 = arith.constant 16 : i32
    %5 = vector.broadcast %c16_i32 : i32 to vector<8x1xi32>
    %6 = arith.cmpi slt, %4, %5 : vector<8x1xi32>
    %7 = tpu.iota {dimensions = array<i32: 1>} : vector<8x64xi32>
    %cst = arith.constant 0.000000e+00 : f32
    %8 = vector.broadcast %cst : f32 to vector<8x1xf32>
    %c0_1 = arith.constant 0 : index
    %c0_2 = arith.constant 0 : index
    %c0_3 = arith.constant 0 : index
    %9 = vector.load %arg2[%c0_1, %c0_2, %c0_3] : memref<4x64x32xf32, #tpu.memory_space<vmem>>, vector<1x64x32xf32>
    %10 = vector.shape_cast %9 : vector<1x64x32xf32> to vector<64x32xf32>
    %c0_4 = arith.constant 0 : index
    %c0_5 = arith.constant 0 : index
    %11 = vector.load %arg3[%c0_4, %c0_5] : memref<4x64xf32, #tpu.memory_space<vmem>>, vector<1x64xf32>
    %cst_6 = arith.constant dense<0.000000e+00> : vector<8x64xf32>
    %12 = tpu.matmul %0, %10, %cst_6 {dimension_numbers = #tpu.dot_dimension_numbers<[1], [1], [0], [0], [0, 0, 1, 0], [], []>} : vector<8x32xf32>, vector<64x32xf32>, vector<8x64xf32> -> vector<8x64xf32>
    %cst_7 = arith.constant 2.000000e+00 : f32
    %13 = vector.broadcast %cst_7 : f32 to vector<8x64xf32>
    %14 = arith.mulf %13, %12 : vector<8x64xf32>
    %15 = vector.broadcast %11 : vector<1x64xf32> to vector<8x64xf32>
    %16 = arith.subf %15, %14 : vector<8x64xf32>
    %cst_8 = arith.constant dense<0x7F800000> : vector<8xf32>
    %17 = vector.multi_reduction <minimumf>, %16, %cst_8 [1] : vector<8x64xf32> to vector<8xf32>
    %18 = vector.shape_cast %17 : vector<8xf32> to vector<8x1xf32>
    %19 = vector.broadcast %18 : vector<8x1xf32> to vector<8x64xf32>
    %20 = arith.cmpf ole, %16, %19 : vector<8x64xf32>
    %c64_i32 = arith.constant 64 : i32
    %21 = vector.broadcast %c64_i32 : i32 to vector<8x64xi32>
    %22 = arith.select %20, %7, %21 : vector<8x64xi1>, vector<8x64xi32>
    %cst_9 = arith.constant dense<2147483647> : vector<8xi32>
    %23 = vector.multi_reduction <minsi>, %22, %cst_9 [1] : vector<8x64xi32> to vector<8xi32>
    %24 = vector.shape_cast %23 : vector<8xi32> to vector<8x1xi32>
    %25 = vector.broadcast %24 : vector<8x1xi32> to vector<8x64xi32>
    %26 = arith.cmpi eq, %7, %25 : vector<8x64xi32>
    %27 = arith.extui %26 : vector<8x64xi1> to vector<8x64xi32>
    %28 = arith.sitofp %27 : vector<8x64xi32> to vector<8x64xf32>
    %cst_10 = arith.constant dense<0.000000e+00> : vector<8x32xf32>
    %29 = tpu.matmul %28, %10, %cst_10 {dimension_numbers = #tpu.dot_dimension_numbers<[1], [0], [0], [1], [0, 0, 1, 1], [], []>} : vector<8x64xf32>, vector<64x32xf32>, vector<8x32xf32> -> vector<8x32xf32>
    %30 = arith.subf %0, %29 : vector<8x32xf32>
    %31 = arith.mulf %30, %30 : vector<8x32xf32>
    %cst_11 = arith.constant dense<0.000000e+00> : vector<8xf32>
    %32 = vector.multi_reduction <add>, %31, %cst_11 [1] : vector<8x32xf32> to vector<8xf32>
    %33 = vector.shape_cast %32 : vector<8xf32> to vector<8x1xf32>
    %34 = arith.addf %8, %33 : vector<8x1xf32>
    %c1 = arith.constant 1 : index
    %c0_12 = arith.constant 0 : index
    %c0_13 = arith.constant 0 : index
    %35 = vector.load %arg2[%c1, %c0_12, %c0_13] : memref<4x64x32xf32, #tpu.memory_space<vmem>>, vector<1x64x32xf32>
    %36 = vector.shape_cast %35 : vector<1x64x32xf32> to vector<64x32xf32>
    %c1_14 = arith.constant 1 : index
    %c0_15 = arith.constant 0 : index
    %37 = vector.load %arg3[%c1_14, %c0_15] : memref<4x64xf32, #tpu.memory_space<vmem>>, vector<1x64xf32>
    %cst_16 = arith.constant dense<0.000000e+00> : vector<8x64xf32>
    %38 = tpu.matmul %30, %36, %cst_16 {dimension_numbers = #tpu.dot_dimension_numbers<[1], [1], [0], [0], [0, 0, 1, 0], [], []>} : vector<8x32xf32>, vector<64x32xf32>, vector<8x64xf32> -> vector<8x64xf32>
    %cst_17 = arith.constant 2.000000e+00 : f32
    %39 = vector.broadcast %cst_17 : f32 to vector<8x64xf32>
    %40 = arith.mulf %39, %38 : vector<8x64xf32>
    %41 = vector.broadcast %37 : vector<1x64xf32> to vector<8x64xf32>
    %42 = arith.subf %41, %40 : vector<8x64xf32>
    %cst_18 = arith.constant dense<0x7F800000> : vector<8xf32>
    %43 = vector.multi_reduction <minimumf>, %42, %cst_18 [1] : vector<8x64xf32> to vector<8xf32>
    %44 = vector.shape_cast %43 : vector<8xf32> to vector<8x1xf32>
    %45 = vector.broadcast %44 : vector<8x1xf32> to vector<8x64xf32>
    %46 = arith.cmpf ole, %42, %45 : vector<8x64xf32>
    %c64_i32_19 = arith.constant 64 : i32
    %47 = vector.broadcast %c64_i32_19 : i32 to vector<8x64xi32>
    %48 = arith.select %46, %7, %47 : vector<8x64xi1>, vector<8x64xi32>
    %cst_20 = arith.constant dense<2147483647> : vector<8xi32>
    %49 = vector.multi_reduction <minsi>, %48, %cst_20 [1] : vector<8x64xi32> to vector<8xi32>
    %50 = vector.shape_cast %49 : vector<8xi32> to vector<8x1xi32>
    %51 = vector.broadcast %50 : vector<8x1xi32> to vector<8x64xi32>
    %52 = arith.cmpi eq, %7, %51 : vector<8x64xi32>
    %53 = arith.extui %52 : vector<8x64xi1> to vector<8x64xi32>
    %54 = arith.sitofp %53 : vector<8x64xi32> to vector<8x64xf32>
    %cst_21 = arith.constant dense<0.000000e+00> : vector<8x32xf32>
    %55 = tpu.matmul %54, %36, %cst_21 {dimension_numbers = #tpu.dot_dimension_numbers<[1], [0], [0], [1], [0, 0, 1, 1], [], []>} : vector<8x64xf32>, vector<64x32xf32>, vector<8x32xf32> -> vector<8x32xf32>
    %56 = arith.subf %30, %55 : vector<8x32xf32>
    %57 = arith.mulf %56, %56 : vector<8x32xf32>
    %cst_22 = arith.constant dense<0.000000e+00> : vector<8xf32>
    %58 = vector.multi_reduction <add>, %57, %cst_22 [1] : vector<8x32xf32> to vector<8xf32>
    %59 = vector.shape_cast %58 : vector<8xf32> to vector<8x1xf32>
    %60 = arith.addf %34, %59 : vector<8x1xf32>
    %c2 = arith.constant 2 : index
    %c0_23 = arith.constant 0 : index
    %c0_24 = arith.constant 0 : index
    %61 = vector.load %arg2[%c2, %c0_23, %c0_24] : memref<4x64x32xf32, #tpu.memory_space<vmem>>, vector<1x64x32xf32>
    %62 = vector.shape_cast %61 : vector<1x64x32xf32> to vector<64x32xf32>
    %c2_25 = arith.constant 2 : index
    %c0_26 = arith.constant 0 : index
    %63 = vector.load %arg3[%c2_25, %c0_26] : memref<4x64xf32, #tpu.memory_space<vmem>>, vector<1x64xf32>
    %cst_27 = arith.constant dense<0.000000e+00> : vector<8x64xf32>
    %64 = tpu.matmul %56, %62, %cst_27 {dimension_numbers = #tpu.dot_dimension_numbers<[1], [1], [0], [0], [0, 0, 1, 0], [], []>} : vector<8x32xf32>, vector<64x32xf32>, vector<8x64xf32> -> vector<8x64xf32>
    %cst_28 = arith.constant 2.000000e+00 : f32
    %65 = vector.broadcast %cst_28 : f32 to vector<8x64xf32>
    %66 = arith.mulf %65, %64 : vector<8x64xf32>
    %67 = vector.broadcast %63 : vector<1x64xf32> to vector<8x64xf32>
    %68 = arith.subf %67, %66 : vector<8x64xf32>
    %cst_29 = arith.constant dense<0x7F800000> : vector<8xf32>
    %69 = vector.multi_reduction <minimumf>, %68, %cst_29 [1] : vector<8x64xf32> to vector<8xf32>
    %70 = vector.shape_cast %69 : vector<8xf32> to vector<8x1xf32>
    %71 = vector.broadcast %70 : vector<8x1xf32> to vector<8x64xf32>
    %72 = arith.cmpf ole, %68, %71 : vector<8x64xf32>
    %c64_i32_30 = arith.constant 64 : i32
    %73 = vector.broadcast %c64_i32_30 : i32 to vector<8x64xi32>
    %74 = arith.select %72, %7, %73 : vector<8x64xi1>, vector<8x64xi32>
    %cst_31 = arith.constant dense<2147483647> : vector<8xi32>
    %75 = vector.multi_reduction <minsi>, %74, %cst_31 [1] : vector<8x64xi32> to vector<8xi32>
    %76 = vector.shape_cast %75 : vector<8xi32> to vector<8x1xi32>
    %77 = vector.broadcast %76 : vector<8x1xi32> to vector<8x64xi32>
    %78 = arith.cmpi eq, %7, %77 : vector<8x64xi32>
    %79 = arith.extui %78 : vector<8x64xi1> to vector<8x64xi32>
    %80 = arith.sitofp %79 : vector<8x64xi32> to vector<8x64xf32>
    %cst_32 = arith.constant dense<0.000000e+00> : vector<8x32xf32>
    %81 = tpu.matmul %80, %62, %cst_32 {dimension_numbers = #tpu.dot_dimension_numbers<[1], [0], [0], [1], [0, 0, 1, 1], [], []>} : vector<8x64xf32>, vector<64x32xf32>, vector<8x32xf32> -> vector<8x32xf32>
    %82 = arith.subf %56, %81 : vector<8x32xf32>
    %83 = arith.mulf %82, %82 : vector<8x32xf32>
    %cst_33 = arith.constant dense<0.000000e+00> : vector<8xf32>
    %84 = vector.multi_reduction <add>, %83, %cst_33 [1] : vector<8x32xf32> to vector<8xf32>
    %85 = vector.shape_cast %84 : vector<8xf32> to vector<8x1xf32>
    %86 = arith.addf %60, %85 : vector<8x1xf32>
    %c3 = arith.constant 3 : index
    %c0_34 = arith.constant 0 : index
    %c0_35 = arith.constant 0 : index
    %87 = vector.load %arg2[%c3, %c0_34, %c0_35] : memref<4x64x32xf32, #tpu.memory_space<vmem>>, vector<1x64x32xf32>
    %88 = vector.shape_cast %87 : vector<1x64x32xf32> to vector<64x32xf32>
    %c3_36 = arith.constant 3 : index
    %c0_37 = arith.constant 0 : index
    %89 = vector.load %arg3[%c3_36, %c0_37] : memref<4x64xf32, #tpu.memory_space<vmem>>, vector<1x64xf32>
    %cst_38 = arith.constant dense<0.000000e+00> : vector<8x64xf32>
    %90 = tpu.matmul %82, %88, %cst_38 {dimension_numbers = #tpu.dot_dimension_numbers<[1], [1], [0], [0], [0, 0, 1, 0], [], []>} : vector<8x32xf32>, vector<64x32xf32>, vector<8x64xf32> -> vector<8x64xf32>
    %cst_39 = arith.constant 2.000000e+00 : f32
    %91 = vector.broadcast %cst_39 : f32 to vector<8x64xf32>
    %92 = arith.mulf %91, %90 : vector<8x64xf32>
    %93 = vector.broadcast %89 : vector<1x64xf32> to vector<8x64xf32>
    %94 = arith.subf %93, %92 : vector<8x64xf32>
    %cst_40 = arith.constant dense<0x7F800000> : vector<8xf32>
    %95 = vector.multi_reduction <minimumf>, %94, %cst_40 [1] : vector<8x64xf32> to vector<8xf32>
    %96 = vector.shape_cast %95 : vector<8xf32> to vector<8x1xf32>
    %97 = vector.broadcast %96 : vector<8x1xf32> to vector<8x64xf32>
    %98 = arith.cmpf ole, %94, %97 : vector<8x64xf32>
    %c64_i32_41 = arith.constant 64 : i32
    %99 = vector.broadcast %c64_i32_41 : i32 to vector<8x64xi32>
    %100 = arith.select %98, %7, %99 : vector<8x64xi1>, vector<8x64xi32>
    %cst_42 = arith.constant dense<2147483647> : vector<8xi32>
    %101 = vector.multi_reduction <minsi>, %100, %cst_42 [1] : vector<8x64xi32> to vector<8xi32>
    %102 = vector.shape_cast %101 : vector<8xi32> to vector<8x1xi32>
    %103 = vector.broadcast %102 : vector<8x1xi32> to vector<8x64xi32>
    %104 = arith.cmpi eq, %7, %103 : vector<8x64xi32>
    %105 = arith.extui %104 : vector<8x64xi1> to vector<8x64xi32>
    %106 = arith.sitofp %105 : vector<8x64xi32> to vector<8x64xf32>
    %cst_43 = arith.constant dense<0.000000e+00> : vector<8x32xf32>
    %107 = tpu.matmul %106, %88, %cst_43 {dimension_numbers = #tpu.dot_dimension_numbers<[1], [0], [0], [1], [0, 0, 1, 1], [], []>} : vector<8x64xf32>, vector<64x32xf32>, vector<8x32xf32> -> vector<8x32xf32>
    %108 = arith.subf %82, %107 : vector<8x32xf32>
    %109 = arith.mulf %108, %108 : vector<8x32xf32>
    %cst_44 = arith.constant dense<0.000000e+00> : vector<8xf32>
    %110 = vector.multi_reduction <add>, %109, %cst_44 [1] : vector<8x32xf32> to vector<8xf32>
    %111 = vector.shape_cast %110 : vector<8xf32> to vector<8x1xf32>
    %112 = arith.addf %86, %111 : vector<8x1xf32>
    %113 = arith.subf %0, %108 : vector<8x32xf32>
    %c0_45 = arith.constant 0 : index
    %c0_46 = arith.constant 0 : index
    %114 = vector.load %arg4[%c0_45, %c0_46] : memref<8x32xf32, #tpu.memory_space<vmem>>, vector<8x32xf32>
    tpu.vector_store %arg4[%c0_45, %c0_46], %113 {strides = array<i32>} : memref<8x32xf32, #tpu.memory_space<vmem>>, vector<8x32xf32>,
    %115 = tpu.concatenate %24, %50, %76, %102 in 1 : vector<8x1xi32>, vector<8x1xi32>, vector<8x1xi32>, vector<8x1xi32> -> vector<8x4xi32>
    %c0_47 = arith.constant 0 : index
    %c0_48 = arith.constant 0 : index
    %116 = vector.load %arg5[%c0_47, %c0_48] : memref<8x4xi32, #tpu.memory_space<vmem>>, vector<8x4xi32>
    tpu.vector_store %arg5[%c0_47, %c0_48], %115 {strides = array<i32>} : memref<8x4xi32, #tpu.memory_space<vmem>>, vector<8x4xi32>,
    %cst_49 = arith.constant 0.000000e+00 : f32
    %117 = vector.broadcast %cst_49 : f32 to vector<8x1xf32>
    %118 = arith.select %6, %112, %117 : vector<8x1xi1>, vector<8x1xf32>
    %119 = vector.shape_cast %118 : vector<8x1xf32> to vector<1x8x1xf32>
    %cst_50 = arith.constant dense<0.000000e+00> : vector<1xf32>
    %120 = vector.multi_reduction <add>, %119, %cst_50 [1, 2] : vector<1x8x1xf32> to vector<1xf32>
    %121 = vector.shape_cast %120 : vector<1xf32> to vector<1x1x1xf32>
    %122 = vector.extract %121[0, 0, 0] : f32 from vector<1x1x1xf32>
    %123 = vector.broadcast %122 : f32 to vector<1x8x128xf32>
    %c0_51 = arith.constant 0 : index
    %c0_52 = arith.constant 0 : index
    %c0_53 = arith.constant 0 : index
    %124 = vector.load %arg6[%c0_51, %c0_52, %c0_53] : memref<1x8x128xf32, #tpu.memory_space<vmem>>, vector<1x8x128xf32>
    tpu.vector_store %arg6[%c0_51, %c0_52, %c0_53], %123 {strides = array<i32>} : memref<1x8x128xf32, #tpu.memory_space<vmem>>, vector<1x8x128xf32>,
    return
  }
  func.func @transform_0(%arg0: i32) -> (i32, i32) {
    %c0_i32 = arith.constant 0 : i32
    %c0_i32_0 = arith.constant 0 : i32
    return %arg0, %c0_i32 : i32, i32
  }
  func.func @transform_1(%arg0: i32) -> (i32, i32, i32) {
    %c0_i32 = arith.constant 0 : i32
    %c0_i32_0 = arith.constant 0 : i32
    %c0_i32_1 = arith.constant 0 : i32
    %c0_i32_2 = arith.constant 0 : i32
    return %c0_i32, %c0_i32_0, %c0_i32_1 : i32, i32, i32
  }
  func.func @transform_2(%arg0: i32) -> (i32, i32) {
    %c0_i32 = arith.constant 0 : i32
    %c0_i32_0 = arith.constant 0 : i32
    %c0_i32_1 = arith.constant 0 : i32
    return %c0_i32, %c0_i32_0 : i32, i32
  }
  func.func @transform_3(%arg0: i32) -> (i32, i32) {
    %c0_i32 = arith.constant 0 : i32
    %c0_i32_0 = arith.constant 0 : i32
    return %arg0, %c0_i32 : i32, i32
  }
  func.func @transform_4(%arg0: i32) -> (i32, i32) {
    %c0_i32 = arith.constant 0 : i32
    %c0_i32_0 = arith.constant 0 : i32
    return %arg0, %c0_i32 : i32, i32
  }
  func.func @transform_5(%arg0: i32) -> (i32, i32, i32) {
    %c0_i32 = arith.constant 0 : i32
    %c0_i32_0 = arith.constant 0 : i32
    %c0_i32_1 = arith.constant 0 : i32
    return %arg0, %c0_i32, %c0_i32_0 : i32, i32, i32
  }
}

</mosaic_0001>

<llo_original>
// kernel: tpu_custom_call.1
$region0: #{tpu_custom_call.1}
  #allocation0 [shape = 'u32[]', space=smem, size = 0x4, offset = 0x4, fixed_abs, tag = 'smem constant byte address 0x4 - core index']
  #allocation1 [shape = 'u32[144,128]{1,0:T(1,128)}', space=vmem, size = 0x12000, scoped, tag = 'internal scratch']
  %s0 = inlined_call_operand.vmem [shape: f32[16,32], index: 0, kind: input, shape index: {}]
  %s1 = inlined_call_operand.vmem [shape: f32[4,64,32], index: 1, kind: input, shape index: {}]
  %s2 = inlined_call_operand.vmem [shape: f32[4,64], index: 2, kind: input, shape index: {}]
  %s3 = inlined_call_operand.hbm [shape: f32[16,32], index: 3, kind: output, shape index: {0}]
  %s4 = inlined_call_operand.vmem [shape: s32[16,4], index: 4, kind: output, shape index: {1}]
  %s5 = inlined_call_operand.hbm [shape: f32[2,8,128], index: 5, kind: output, shape index: {2}]
  %6 = xla_tuple %s3, %s4, %s5
  %s7 = sld [smem:[#allocation0]]
  $region61: #{tpu_custom_call.1} parent=0
    _
  %s9 = ssub.s32 1, %s7
  %s10 = scalar_select 0, %s9, %s7
  $region1: #{tpu_custom_call.1} parent=0
    #allocation2 [shape = 'u8[8192]{0}', space=vmem, size = 0x2000, scoped, tag = 'output window, operand 0']
    #allocation3 [shape = 's32[2]{0}', space=sflag, size = 0x8, scoped, tag = 'scoped memory for tpu_custom_call.1']
    #allocation4 [shape = 'u8[8192]{0}', space=vmem, size = 0x2000, scoped, tag = 'output window, operand 2']
    #allocation5 [shape = 's32[2]{0}', space=sflag, size = 0x8, scoped, tag = 'scoped memory for tpu_custom_call.1']
    %11 = vsyncpa [#allocation3], 0
    %s12 = scalar_lea.sflag [#allocation3], 1
    %13 = vsyncpa %s12, 0
    %14 = vsyncpa [#allocation5], 0
    %s15 = scalar_lea.sflag [#allocation5], 1
    %16 = vsyncpa %s15, 0
    loop: start=0, step=1, limit=4
    $region2: #{tpu_custom_call.1} parent=1 // loop_pre_header
      _
    $region3: #{tpu_custom_call.1} parent=1 // loop_header
      %s18 = sphi 0, %s22
      %p19 = scmp.ge.s32.totalorder %s18, 4
      %s28 = sphi 0, %s30
      %s31 = sphi 0, %s28
      %s32 = sphi 0, %s31
      %s48 = sphi 0, %s32
      %s52 = sphi 0, %s52
      %s54 = sphi 0, %s52
      %s55 = sphi 0, %s54
      %s69 = sphi 0, %s55
      %s73 = sphi 0, %s73
      %s75 = sphi 0, %s73
      %s76 = sphi 0, %s75
      %s90 = sphi 0, %s76
      %s96 = sphi 0, %s98
      %s99 = sphi 0, %s96
      %s100 = sphi 0, %s99
      %s116 = sphi 0, %s100
      %s122 = sphi 0, %s124
      %s125 = sphi 0, %s122
      %s126 = sphi 0, %s125
      %s142 = sphi 0, %s126
      %s148 = sphi 0, %s150
      %s151 = sphi 0, %s148
      %s152 = sphi 0, %s151
      %s168 = sphi 0, %s152
    $region4: #{tpu_custom_call.1} parent=1 // loop_header_branch
      %21 = sbr.rel (%p19) target = $region8
    $region5: #{tpu_custom_call.1} parent=1 // loop_body
      %s23 = ssub.s32 %s18, 1
      %s24 = ssub.s32 %s18, 2
      %s25 = sadd.s32 %s18, 1
      %s26 = ssub.s32 %s18, %s25
      %p27 = scmp.eq.s32.totalorder %s26, 0
      %s29 = sadd.s32 %s28, 1
      %s30 = scalar_select %p27, %s28, %s29
      %p33 = pneg %p27
      %p34 = scmp.eq.s32.totalorder %s18, 1
      %p35 = por %p33, %p34
      %p36 = scmp.ne.s32.totalorder %s28, %s31
      %p37 = scmp.eq.s32.totalorder %s18, 0
      %p38 = por %p36, %p37
      %p39 = scmp.ne.s32.totalorder %s28, %s31
      %p40 = scmp.eq.s32.totalorder %s23, 1
      %p41 = por %p39, %p40
      %p42 = scmp.ne.s32.totalorder %s31, %s32
      %p43 = scmp.eq.s32.totalorder %s23, 0
      %p44 = por %p42, %p43
      %p45 = scmp.ne.s32.totalorder %s31, %s32
      %p46 = scmp.eq.s32.totalorder %s24, 1
      %p47 = por %p45, %p46
      %p49 = scmp.ne.s32.totalorder %s32, %s48
      %p50 = scmp.eq.s32.totalorder %s24, 0
      %p51 = por %p49, %p50
      %s53 = sadd.s32 %s52, 1
      %p56 = scmp.eq.s32.totalorder %s18, 1
      %p57 = scmp.ne.s32.totalorder %s52, %s54
      %p58 = scmp.eq.s32.totalorder %s18, 0
      %p59 = por %p57, %p58
      %p60 = scmp.ne.s32.totalorder %s52, %s54
      %p61 = scmp.eq.s32.totalorder %s23, 1
      %p62 = por %p60, %p61
      %p63 = scmp.ne.s32.totalorder %s54, %s55
      %p64 = scmp.eq.s32.totalorder %s23, 0
      %p65 = por %p63, %p64
      %p66 = scmp.ne.s32.totalorder %s54, %s55
      %p67 = scmp.eq.s32.totalorder %s24, 1
      %p68 = por %p66, %p67
      %p70 = scmp.ne.s32.totalorder %s55, %s69
      %p71 = scmp.eq.s32.totalorder %s24, 0
      %p72 = por %p70, %p71
      %s74 = sadd.s32 %s73, 1
      %p77 = scmp.eq.s32.totalorder %s18, 1
      %p78 = scmp.ne.s32.totalorder %s73, %s75
      %p79 = scmp.eq.s32.totalorder %s18, 0
      %p80 = por %p78, %p79
      %p81 = scmp.ne.s32.totalorder %s73, %s75
      %p82 = scmp.eq.s32.totalorder %s23, 1
      %p83 = por %p81, %p82
      %p84 = scmp.ne.s32.totalorder %s75, %s76
      %p85 = scmp.eq.s32.totalorder %s23, 0
      %p86 = por %p84, %p85
      %p87 = scmp.ne.s32.totalorder %s75, %s76
      %p88 = scmp.eq.s32.totalorder %s24, 1
      %p89 = por %p87, %p88
      %p91 = scmp.ne.s32.totalorder %s76, %s90
      %p92 = scmp.eq.s32.totalorder %s24, 0
      %p93 = por %p91, %p92
      %s94 = ssub.s32 %s18, %s25
      %p95 = scmp.eq.s32.totalorder %s94, 0
      %s97 = sadd.s32 %s96, 1
      %s98 = scalar_select %p95, %s96, %s97
      %p101 = pneg %p95
      %p102 = scmp.eq.s32.totalorder %s18, 1
      %p103 = por %p101, %p102
      %p104 = scmp.ne.s32.totalorder %s96, %s99
      %p105 = scmp.eq.s32.totalorder %s18, 0
      %p106 = por %p104, %p105
      %p107 = scmp.ne.s32.totalorder %s96, %s99
      %p108 = scmp.eq.s32.totalorder %s23, 1
      %p109 = por %p107, %p108
      %p110 = scmp.ne.s32.totalorder %s99, %s100
      %p111 = scmp.eq.s32.totalorder %s23, 0
      %p112 = por %p110, %p111
      %p113 = scmp.ne.s32.totalorder %s99, %s100
      %p114 = scmp.eq.s32.totalorder %s24, 1
      %p115 = por %p113, %p114
      %p117 = scmp.ne.s32.totalorder %s100, %s116
      %p118 = scmp.eq.s32.totalorder %s24, 0
      %p119 = por %p117, %p118
      %s120 = ssub.s32 %s18, %s25
      %p121 = scmp.eq.s32.totalorder %s120, 0
      %s123 = sadd.s32 %s122, 1
      %s124 = scalar_select %p121, %s122, %s123
      %p127 = pneg %p121
      %p128 = scmp.eq.s32.totalorder %s18, 1
      %p129 = por %p127, %p128
      %p130 = scmp.ne.s32.totalorder %s122, %s125
      %p131 = scmp.eq.s32.totalorder %s18, 0
      %p132 = por %p130, %p131
      %p133 = scmp.ne.s32.totalorder %s122, %s125
      %p134 = scmp.eq.s32.totalorder %s23, 1
      %p135 = por %p133, %p134
      %p136 = scmp.ne.s32.totalorder %s125, %s126
      %p137 = scmp.eq.s32.totalorder %s23, 0
      %p138 = por %p136, %p137
      %p139 = scmp.ne.s32.totalorder %s125, %s126
      %p140 = scmp.eq.s32.totalorder %s24, 1
      %p141 = por %p139, %p140
      %p143 = scmp.ne.s32.totalorder %s126, %s142
      %p144 = scmp.eq.s32.totalorder %s24, 0
      %p145 = por %p143, %p144
      %s146 = ssub.s32 %s18, %s25
      %p147 = scmp.eq.s32.totalorder %s146, 0
      %s149 = sadd.s32 %s148, 1
      %s150 = scalar_select %p147, %s148, %s149
      %p153 = pneg %p147
      %p154 = scmp.eq.s32.totalorder %s18, 1
      %p155 = por %p153, %p154
      %p156 = scmp.ne.s32.totalorder %s148, %s151
      %p157 = scmp.eq.s32.totalorder %s18, 0
      %p158 = por %p156, %p157
      %p159 = scmp.ne.s32.totalorder %s148, %s151
      %p160 = scmp.eq.s32.totalorder %s23, 1
      %p161 = por %p159, %p160
      %p162 = scmp.ne.s32.totalorder %s151, %s152
      %p163 = scmp.eq.s32.totalorder %s23, 0
      %p164 = por %p162, %p163
      %p165 = scmp.ne.s32.totalorder %s151, %s152
      %p166 = scmp.eq.s32.totalorder %s24, 1
      %p167 = por %p165, %p166
      %p169 = scmp.ne.s32.totalorder %s152, %s168
      %p170 = scmp.eq.s32.totalorder %s24, 0
      %p171 = por %p169, %p170
      %p172 = scmp.le.s32.totalorder 1, %s18
      %p173 = scmp.lt.s32.totalorder %s18, 3
      %p174 = pnand %p172, %p173
      %p175 = pneg %p174
      // Predicated region
      $region9: #{tpu_custom_call.1} parent=5 // pred_check
        _
      $region10: #{tpu_custom_call.1} parent=5 // pred_check_branch
        %177 = sbr.rel (%p174) target = $region12
      $region11: #{tpu_custom_call.1} parent=5 // pred_region
        %s178 = ssub.s32 %s18, 1
        // Predicated region
        $region13: #{tpu_custom_call.1} parent=11 // pred_check
          %p179 = pneg %p65
        $region14: #{tpu_custom_call.1} parent=11 // pred_check_branch
          %181 = sbr.rel (%p179) target = $region16
        $region15: #{tpu_custom_call.1} parent=11 // pred_region
          _
        $region16: #{tpu_custom_call.1} parent=11 // pred_fallthru
          _
        // Predicated region
        $region17: #{tpu_custom_call.1} parent=11 // pred_check
          %p182 = pneg %p86
        $region18: #{tpu_custom_call.1} parent=11 // pred_check_branch
          %184 = sbr.rel (%p182) target = $region20
        $region19: #{tpu_custom_call.1} parent=11 // pred_region
          _
        $region20: #{tpu_custom_call.1} parent=11 // pred_fallthru
          _
      $region12: #{tpu_custom_call.1} parent=5 // pred_fallthru
        _
      %p185 = scmp.lt.s32.totalorder %s18, 2
      // Predicated region
      $region21: #{tpu_custom_call.1} parent=5 // pred_check
        %p186 = pneg %p185
      $region22: #{tpu_custom_call.1} parent=5 // pred_check_branch
        %188 = sbr.rel (%p186) target = $region24
      $region23: #{tpu_custom_call.1} parent=5 // pred_region
        // Predicated region
        $region25: #{tpu_custom_call.1} parent=23 // pred_check
          %p189 = pneg %p38
        $region26: #{tpu_custom_call.1} parent=23 // pred_check_branch
          %191 = sbr.rel (%p189) target = $region28
        $region27: #{tpu_custom_call.1} parent=23 // pred_region
          %p192 = scmp.lt.s32.totalorder %s18, 1
          %s193 = scalar_select %p192, %s18, 1
          %s194 = smul.addr %s193, 8
          %s195 = scalar_lea.vmem %s0, %s194
        $region28: #{tpu_custom_call.1} parent=23 // pred_fallthru
          _
      $region24: #{tpu_custom_call.1} parent=5 // pred_fallthru
        _
      %p196 = scmp.le.s32.totalorder 1, %s18
      %p197 = scmp.lt.s32.totalorder %s18, 3
      %p198 = pnand %p196, %p197
      %p199 = pneg %p198
      // Predicated region
      $region29: #{tpu_custom_call.1} parent=5 // pred_check
        _
      $region30: #{tpu_custom_call.1} parent=5 // pred_check_branch
        %201 = sbr.rel (%p198) target = $region32
      $region31: #{tpu_custom_call.1} parent=5 // pred_region
        %s202 = ssub.s32 %s18, 1
        %p203 = scmp.lt.s32.totalorder %s23, 1
        %s204 = scalar_select %p203, %s23, 1
        %s205 = smul.addr %s204, 8
        %s206 = scalar_lea.vmem %s0, %s205
        %p207 = pneg %p44
        %p208 = pneg %p41
        %p209 = pneg %p65
        %p210 = pneg %p62
        %p211 = pneg %p86
        %p212 = pneg %p83
        %p213 = pneg %p112
        %p214 = pneg %p109
        %s215 = sand.u32 %s99, 1
        %s216 = scalar_lea.sflag [#allocation3], %s215
        %s217 = sand.u32 %s99, 1
        %s218 = smul.addr %s217, 8
        %s219 = scalar_lea.vmem [#allocation2], %s218
        %p220 = pneg %p138
        %p221 = pneg %p135
        %p222 = scmp.lt.s32.totalorder %s23, 1
        %s223 = scalar_select %p222, %s23, 1
        %s224 = smul.addr %s223, 8
        %s225 = scalar_lea.vmem %s4, %s224
        %p226 = pneg %p164
        %p227 = pneg %p161
        %s228 = sand.u32 %s151, 1
        %s229 = scalar_lea.sflag [#allocation5], %s228
        %s230 = sand.u32 %s151, 1
        %s231 = smul.addr %s230, 8
        %s232 = scalar_lea.vmem [#allocation4], %s231
        %p233 = scmp.lt.s32.totalorder %s23, 1
        %s234 = scalar_select %p233, %s23, 1
        %s235 = smul.addr %s234, 8
        %s236 = scalar_lea.vmem %s0, %s235
        %p237 = scmp.lt.s32.totalorder %s23, 1
        %s238 = scalar_select %p237, %s23, 1
        %s239 = smul.addr %s238, 8
        %s240 = scalar_lea.vmem %s4, %s239
        %v241 = vld [vmem:[%s236] sm:$0xff]
        %s242 = smul.u32 %s23, 8
        %v243 = vlaneseq
        %v244 = vshrl.u32 %v243, 7
        %v245 = vstv %s242
        %v246 = vadd.s32 %v245, %v244
        %vm247 = vcmp.lt.s32.totalorder %v246, 16
        %v248 = vlaneseq
        %v249 = vand.u32 %v248, 127
        %v250 = vld [vmem:[%s1] sm:$0xff]
        %v251 = vld [vmem:[%s1 + $0x8] sm:$0xff]
        %v252 = vld [vmem:[%s1 + $0x10] sm:$0xff]
        %v253 = vld [vmem:[%s1 + $0x18] sm:$0xff]
        %v254 = vld [vmem:[%s1 + $0x20] sm:$0xff]
        %v255 = vld [vmem:[%s1 + $0x28] sm:$0xff]
        %v256 = vld [vmem:[%s1 + $0x30] sm:$0xff]
        %v257 = vld [vmem:[%s1 + $0x38] sm:$0xff]
        %v258 = vld [vmem:[%s2] sm:$0x1]
        %vm259 = vcmask 261120
        %v261 = vsel %vm259, %v241, 0
        %v264 = vsel %vm259, %v250, 0
        %v267 = vsel %vm259, %v251, 0
        %v270 = vsel %vm259, %v252, 0
        %v273 = vsel %vm259, %v253, 0
        %v276 = vsel %vm259, %v254, 0
        %v279 = vsel %vm259, %v255, 0
        %v282 = vsel %vm259, %v256, 0
        %v285 = vsel %vm259, %v257, 0
        %287 = vmatprep.subr.mxu0 0.0
        %288 = vmatpush1.xpose.msra.mxu0 0.0
        %289 = vmatprep.subr.mxu0 0.0
        %290 = vmatpush1.xpose.msra.mxu0 0.0
        %291 = vmatprep.subr.mxu0 0.0
        %292 = vmatpush1.xpose.msra.mxu0 0.0
        %293 = vmatprep.subr.mxu0 0.0
        %294 = vmatpush1.xpose.msra.mxu0 0.0
        %295 = vmatprep.subr.mxu0 0.0
        %296 = vmatpush1.xpose.msra.mxu0 0.0
        %297 = vmatprep.subr.mxu0 0.0
        %298 = vmatpush1.xpose.msra.mxu0 0.0
        %299 = vmatprep.subr.mxu0 0.0
        %300 = vmatpush1.xpose.msra.mxu0 0.0
        %301 = vmatprep.subr.mxu0 0.0
        %302 = vmatpush1.xpose.msra.mxu0 0.0
        %303 = vmatprep.subr.mxu0 0.0
        %304 = vmatpush1.xpose.msra.mxu0 %v285
        %305 = vmatprep.subr.mxu0 0.0
        %306 = vmatpush1.xpose.msra.mxu0 %v282
        %307 = vmatprep.subr.mxu0 0.0
        %308 = vmatpush1.xpose.msra.mxu0 %v279
        %309 = vmatprep.subr.mxu0 0.0
        %310 = vmatpush1.xpose.msra.mxu0 %v276
        %311 = vmatprep.subr.mxu0 0.0
        %312 = vmatpush1.xpose.msra.mxu0 %v273
        %313 = vmatprep.subr.mxu0 0.0
        %314 = vmatpush1.xpose.msra.mxu0 %v270
        %315 = vmatprep.subr.mxu0 0.0
        %316 = vmatpush1.xpose.msra.mxu0 %v267
        %317 = vmatprep.subr.mxu0 0.0
        %318 = vmatpush1.xpose.msra.mxu0 %v264
        %319 = vmatprep.subr.mxu0 0.0
        %320 = vmatpush2.xpose.msra.mxu0 0.0
        %321 = vmatprep.subr.mxu0 0.0
        %322 = vmatpush2.xpose.msra.mxu0 0.0
        %323 = vmatprep.subr.mxu0 0.0
        %324 = vmatpush2.xpose.msra.mxu0 0.0
        %325 = vmatprep.subr.mxu0 0.0
        %326 = vmatpush2.xpose.msra.mxu0 0.0
        %327 = vmatprep.subr.mxu0 0.0
        %328 = vmatpush2.xpose.msra.mxu0 0.0
        %329 = vmatprep.subr.mxu0 0.0
        %330 = vmatpush2.xpose.msra.mxu0 0.0
        %331 = vmatprep.subr.mxu0 0.0
        %332 = vmatpush2.xpose.msra.mxu0 0.0
        %333 = vmatprep.subr.mxu0 0.0
        %334 = vmatpush2.xpose.msra.mxu0 0.0
        %335 = vmatprep.subr.mxu0 0.0
        %336 = vmatpush2.xpose.msra.mxu0 0.0
        %337 = vmatprep.subr.mxu0 0.0
        %338 = vmatpush2.xpose.msra.mxu0 0.0
        %339 = vmatprep.subr.mxu0 0.0
        %340 = vmatpush2.xpose.msra.mxu0 0.0
        %341 = vmatprep.subr.mxu0 0.0
        %342 = vmatpush2.xpose.msra.mxu0 0.0
        %343 = vmatprep.subr.mxu0 0.0
        %344 = vmatpush2.xpose.msra.mxu0 0.0
        %345 = vmatprep.subr.mxu0 0.0
        %346 = vmatpush2.xpose.msra.mxu0 0.0
        %347 = vmatprep.subr.mxu0 0.0
        %348 = vmatpush2.xpose.msra.mxu0 0.0
        %349 = vmatprep.subr.mxu0 0.0
        %350 = vmatpush2.xpose.msra.mxu0 0.0
        %351 = vmatprep.mubr.f32.mxu0 0.0
        %352 = vmatmul.mubr.f32.gmra.mxu0 %v261
        %v353 = vpop.f32.mrf.mxu0
        %v354 = vadd.f32 0.0, %v353
        %v355 = vpop.f32.mrf.mxu0
        %356 = vdwg.mxu0
        %v357 = vmul.f32 %v354, 2.0
        %v358 = vlaneseq
        %v359 = vshrl.u32 %v358, 7
        %v360 = vsub.s32 0, %v359
        %v361 = vrot.slane %v258, %v360
        %v362 = vsub.f32 %v361, %v357
        %vm363 = vcmask 523264
        %v364 = vsel %vm363, %v362, inf
        %365 = vmin.xlane.f32.xlu0 %v364
        %v366 = vpop.xlane.xlu0 %365
        %vm367 = vcmp.le.f32.partialorder %v362, %v366
        %v368 = vsel %vm367, %v249, 64
        %v369 = vsel %vm363, %v368, 2147483647
        %v370 = vand.u32 %v369, 65535
        %v371 = vshra.s32 %v369, 16
        %v372 = vcvt.s32.f32 %v370
        %v373 = vcvt.s32.f32 %v371
        %374 = vmin.xlane.f32.xlu0 %v373
        %v375 = vpop.xlane.xlu0 %374
        %vm376 = vcmp.eq.f32.partialorder %v373, %v375
        %v377 = vsel %vm376, %v372, inf
        %378 = vmin.xlane.f32.xlu0 %v377
        %v379 = vpop.xlane.xlu0 %378
        %v380 = vcvt.f32.s32 %v379
        %v381 = vcvt.f32.s32 %v375
        %v382 = vshll.u32 %v381, 16
        %v383 = vadd.s32 %v382, %v380
        %vm384 = vcmp.eq.s32.totalorder %v249, %v383
        %v385 = vsel %vm384, 1, 0
        %v386 = vcvt.s32.f32 %v385
        %v388 = vsel %vm363, %v386, 0
        %390 = vmatprep.subr.mxu0 0.0
        %391 = vmatpush1.msra.mxu0 0.0
        %392 = vmatprep.subr.mxu0 0.0
        %393 = vmatpush1.msra.mxu0 0.0
        %394 = vmatprep.subr.mxu0 0.0
        %395 = vmatpush1.msra.mxu0 0.0
        %396 = vmatprep.subr.mxu0 0.0
        %397 = vmatpush1.msra.mxu0 0.0
        %398 = vmatprep.subr.mxu0 0.0
        %399 = vmatpush1.msra.mxu0 0.0
        %400 = vmatprep.subr.mxu0 0.0
        %401 = vmatpush1.msra.mxu0 0.0
        %402 = vmatprep.subr.mxu0 0.0
        %403 = vmatpush1.msra.mxu0 0.0
        %404 = vmatprep.subr.mxu0 0.0
        %405 = vmatpush1.msra.mxu0 0.0
        %406 = vmatprep.subr.mxu0 0.0
        %407 = vmatpush1.msra.mxu0 %v257
        %408 = vmatprep.subr.mxu0 0.0
        %409 = vmatpush1.msra.mxu0 %v256
        %410 = vmatprep.subr.mxu0 0.0
        %411 = vmatpush1.msra.mxu0 %v255
        %412 = vmatprep.subr.mxu0 0.0
        %413 = vmatpush1.msra.mxu0 %v254
        %414 = vmatprep.subr.mxu0 0.0
        %415 = vmatpush1.msra.mxu0 %v253
        %416 = vmatprep.subr.mxu0 0.0
        %417 = vmatpush1.msra.mxu0 %v252
        %418 = vmatprep.subr.mxu0 0.0
        %419 = vmatpush1.msra.mxu0 %v251
        %420 = vmatprep.subr.mxu0 0.0
        %421 = vmatpush1.msra.mxu0 %v250
        %422 = vmatprep.subr.mxu0 0.0
        %423 = vmatpush2.msra.mxu0 0.0
        %424 = vmatprep.subr.mxu0 0.0
        %425 = vmatpush2.msra.mxu0 0.0
        %426 = vmatprep.subr.mxu0 0.0
        %427 = vmatpush2.msra.mxu0 0.0
        %428 = vmatprep.subr.mxu0 0.0
        %429 = vmatpush2.msra.mxu0 0.0
        %430 = vmatprep.subr.mxu0 0.0
        %431 = vmatpush2.msra.mxu0 0.0
        %432 = vmatprep.subr.mxu0 0.0
        %433 = vmatpush2.msra.mxu0 0.0
        %434 = vmatprep.subr.mxu0 0.0
        %435 = vmatpush2.msra.mxu0 0.0
        %436 = vmatprep.subr.mxu0 0.0
        %437 = vmatpush2.msra.mxu0 0.0
        %438 = vmatprep.subr.mxu0 0.0
        %439 = vmatpush2.msra.mxu0 0.0
        %440 = vmatprep.subr.mxu0 0.0
        %441 = vmatpush2.msra.mxu0 0.0
        %442 = vmatprep.subr.mxu0 0.0
        %443 = vmatpush2.msra.mxu0 0.0
        %444 = vmatprep.subr.mxu0 0.0
        %445 = vmatpush2.msra.mxu0 0.0
        %446 = vmatprep.subr.mxu0 0.0
        %447 = vmatpush2.msra.mxu0 0.0
        %448 = vmatprep.subr.mxu0 0.0
        %449 = vmatpush2.msra.mxu0 0.0
        %450 = vmatprep.subr.mxu0 0.0
        %451 = vmatpush2.msra.mxu0 0.0
        %452 = vmatprep.subr.mxu0 0.0
        %453 = vmatpush2.msra.mxu0 0.0
        %454 = vmatprep.mubr.f32.mxu0 0.0
        %455 = vmatmul.mubr.f32.gmra.mxu0 %v388
        %v456 = vpop.f32.mrf.mxu0
        %v457 = vadd.f32 0.0, %v456
        %v458 = vpop.f32.mrf.mxu0
        %459 = vdwg.mxu0
        %v460 = vsub.f32 %v241, %v457
        %v461 = vmul.f32 %v460, %v460
        %v462 = vsel %vm259, %v461, 0.0
        %463 = vadd.xlane.f32.xlu0 %v462
        %v464 = vpop.xlane.xlu0 %463
        %v465 = vadd.f32 %v464, 0.0
        %s466 = scalar_lea.vmem %s1, 64
        %v467 = vld [vmem:[%s466] sm:$0xff]
        %v468 = vld [vmem:[%s466 + $0x8] sm:$0xff]
        %v469 = vld [vmem:[%s466 + $0x10] sm:$0xff]
        %v470 = vld [vmem:[%s466 + $0x18] sm:$0xff]
        %v471 = vld [vmem:[%s466 + $0x20] sm:$0xff]
        %v472 = vld [vmem:[%s466 + $0x28] sm:$0xff]
        %v473 = vld [vmem:[%s466 + $0x30] sm:$0xff]
        %v474 = vld [vmem:[%s466 + $0x38] sm:$0xff]
        %v475 = vld [vmem:[%s2 + $0x1] sm:$0x1]
        %v477 = vsel %vm259, %v460, 0
        %v480 = vsel %vm259, %v467, 0
        %v483 = vsel %vm259, %v468, 0
        %v486 = vsel %vm259, %v469, 0
        %v489 = vsel %vm259, %v470, 0
        %v492 = vsel %vm259, %v471, 0
        %v495 = vsel %vm259, %v472, 0
        %v498 = vsel %vm259, %v473, 0
        %v501 = vsel %vm259, %v474, 0
        %503 = vmatprep.subr.mxu0 0.0
        %504 = vmatpush1.xpose.msra.mxu0 0.0
        %505 = vmatprep.subr.mxu0 0.0
        %506 = vmatpush1.xpose.msra.mxu0 0.0
        %507 = vmatprep.subr.mxu0 0.0
        %508 = vmatpush1.xpose.msra.mxu0 0.0
        %509 = vmatprep.subr.mxu0 0.0
        %510 = vmatpush1.xpose.msra.mxu0 0.0
        %511 = vmatprep.subr.mxu0 0.0
        %512 = vmatpush1.xpose.msra.mxu0 0.0
        %513 = vmatprep.subr.mxu0 0.0
        %514 = vmatpush1.xpose.msra.mxu0 0.0
        %515 = vmatprep.subr.mxu0 0.0
        %516 = vmatpush1.xpose.msra.mxu0 0.0
        %517 = vmatprep.subr.mxu0 0.0
        %518 = vmatpush1.xpose.msra.mxu0 0.0
        %519 = vmatprep.subr.mxu0 0.0
        %520 = vmatpush1.xpose.msra.mxu0 %v501
        %521 = vmatprep.subr.mxu0 0.0
        %522 = vmatpush1.xpose.msra.mxu0 %v498
        %523 = vmatprep.subr.mxu0 0.0
        %524 = vmatpush1.xpose.msra.mxu0 %v495
        %525 = vmatprep.subr.mxu0 0.0
        %526 = vmatpush1.xpose.msra.mxu0 %v492
        %527 = vmatprep.subr.mxu0 0.0
        %528 = vmatpush1.xpose.msra.mxu0 %v489
        %529 = vmatprep.subr.mxu0 0.0
        %530 = vmatpush1.xpose.msra.mxu0 %v486
        %531 = vmatprep.subr.mxu0 0.0
        %532 = vmatpush1.xpose.msra.mxu0 %v483
        %533 = vmatprep.subr.mxu0 0.0
        %534 = vmatpush1.xpose.msra.mxu0 %v480
        %535 = vmatprep.subr.mxu0 0.0
        %536 = vmatpush2.xpose.msra.mxu0 0.0
        %537 = vmatprep.subr.mxu0 0.0
        %538 = vmatpush2.xpose.msra.mxu0 0.0
        %539 = vmatprep.subr.mxu0 0.0
        %540 = vmatpush2.xpose.msra.mxu0 0.0
        %541 = vmatprep.subr.mxu0 0.0
        %542 = vmatpush2.xpose.msra.mxu0 0.0
        %543 = vmatprep.subr.mxu0 0.0
        %544 = vmatpush2.xpose.msra.mxu0 0.0
        %545 = vmatprep.subr.mxu0 0.0
        %546 = vmatpush2.xpose.msra.mxu0 0.0
        %547 = vmatprep.subr.mxu0 0.0
        %548 = vmatpush2.xpose.msra.mxu0 0.0
        %549 = vmatprep.subr.mxu0 0.0
        %550 = vmatpush2.xpose.msra.mxu0 0.0
        %551 = vmatprep.subr.mxu0 0.0
        %552 = vmatpush2.xpose.msra.mxu0 0.0
        %553 = vmatprep.subr.mxu0 0.0
        %554 = vmatpush2.xpose.msra.mxu0 0.0
        %555 = vmatprep.subr.mxu0 0.0
        %556 = vmatpush2.xpose.msra.mxu0 0.0
        %557 = vmatprep.subr.mxu0 0.0
        %558 = vmatpush2.xpose.msra.mxu0 0.0
        %559 = vmatprep.subr.mxu0 0.0
        %560 = vmatpush2.xpose.msra.mxu0 0.0
        %561 = vmatprep.subr.mxu0 0.0
        %562 = vmatpush2.xpose.msra.mxu0 0.0
        %563 = vmatprep.subr.mxu0 0.0
        %564 = vmatpush2.xpose.msra.mxu0 0.0
        %565 = vmatprep.subr.mxu0 0.0
        %566 = vmatpush2.xpose.msra.mxu0 0.0
        %567 = vmatprep.mubr.f32.mxu0 0.0
        %568 = vmatmul.mubr.f32.gmra.mxu0 %v477
        %v569 = vpop.f32.mrf.mxu0
        %v570 = vadd.f32 0.0, %v569
        %v571 = vpop.f32.mrf.mxu0
        %572 = vdwg.mxu0
        %v573 = vmul.f32 %v570, 2.0
        %v574 = vlaneseq
        %v575 = vshrl.u32 %v574, 7
        %v576 = vsub.s32 0, %v575
        %v577 = vrot.slane %v475, %v576
        %v578 = vsub.f32 %v577, %v573
        %v579 = vsel %vm363, %v578, inf
        %580 = vmin.xlane.f32.xlu0 %v579
        %v581 = vpop.xlane.xlu0 %580
        %vm582 = vcmp.le.f32.partialorder %v578, %v581
        %v583 = vsel %vm582, %v249, 64
        %v584 = vsel %vm363, %v583, 2147483647
        %v585 = vand.u32 %v584, 65535
        %v586 = vshra.s32 %v584, 16
        %v587 = vcvt.s32.f32 %v585
        %v588 = vcvt.s32.f32 %v586
        %589 = vmin.xlane.f32.xlu0 %v588
        %v590 = vpop.xlane.xlu0 %589
        %vm591 = vcmp.eq.f32.partialorder %v588, %v590
        %v592 = vsel %vm591, %v587, inf
        %593 = vmin.xlane.f32.xlu0 %v592
        %v594 = vpop.xlane.xlu0 %593
        %v595 = vcvt.f32.s32 %v594
        %v596 = vcvt.f32.s32 %v590
        %v597 = vshll.u32 %v596, 16
        %v598 = vadd.s32 %v597, %v595
        %vm599 = vcmp.eq.s32.totalorder %v249, %v598
        %v600 = vsel %vm599, 1, 0
        %v601 = vcvt.s32.f32 %v600
        %v603 = vsel %vm363, %v601, 0
        %605 = vmatprep.subr.mxu0 0.0
        %606 = vmatpush1.msra.mxu0 0.0
        %607 = vmatprep.subr.mxu0 0.0
        %608 = vmatpush1.msra.mxu0 0.0
        %609 = vmatprep.subr.mxu0 0.0
        %610 = vmatpush1.msra.mxu0 0.0
        %611 = vmatprep.subr.mxu0 0.0
        %612 = vmatpush1.msra.mxu0 0.0
        %613 = vmatprep.subr.mxu0 0.0
        %614 = vmatpush1.msra.mxu0 0.0
        %615 = vmatprep.subr.mxu0 0.0
        %616 = vmatpush1.msra.mxu0 0.0
        %617 = vmatprep.subr.mxu0 0.0
        %618 = vmatpush1.msra.mxu0 0.0
        %619 = vmatprep.subr.mxu0 0.0
        %620 = vmatpush1.msra.mxu0 0.0
        %621 = vmatprep.subr.mxu0 0.0
        %622 = vmatpush1.msra.mxu0 %v474
        %623 = vmatprep.subr.mxu0 0.0
        %624 = vmatpush1.msra.mxu0 %v473
        %625 = vmatprep.subr.mxu0 0.0
        %626 = vmatpush1.msra.mxu0 %v472
        %627 = vmatprep.subr.mxu0 0.0
        %628 = vmatpush1.msra.mxu0 %v471
        %629 = vmatprep.subr.mxu0 0.0
        %630 = vmatpush1.msra.mxu0 %v470
        %631 = vmatprep.subr.mxu0 0.0
        %632 = vmatpush1.msra.mxu0 %v469
        %633 = vmatprep.subr.mxu0 0.0
        %634 = vmatpush1.msra.mxu0 %v468
        %635 = vmatprep.subr.mxu0 0.0
        %636 = vmatpush1.msra.mxu0 %v467
        %637 = vmatprep.subr.mxu0 0.0
        %638 = vmatpush2.msra.mxu0 0.0
        %639 = vmatprep.subr.mxu0 0.0
        %640 = vmatpush2.msra.mxu0 0.0
        %641 = vmatprep.subr.mxu0 0.0
        %642 = vmatpush2.msra.mxu0 0.0
        %643 = vmatprep.subr.mxu0 0.0
        %644 = vmatpush2.msra.mxu0 0.0
        %645 = vmatprep.subr.mxu0 0.0
        %646 = vmatpush2.msra.mxu0 0.0
        %647 = vmatprep.subr.mxu0 0.0
        %648 = vmatpush2.msra.mxu0 0.0
        %649 = vmatprep.subr.mxu0 0.0
        %650 = vmatpush2.msra.mxu0 0.0
        %651 = vmatprep.subr.mxu0 0.0
        %652 = vmatpush2.msra.mxu0 0.0
        %653 = vmatprep.subr.mxu0 0.0
        %654 = vmatpush2.msra.mxu0 0.0
        %655 = vmatprep.subr.mxu0 0.0
        %656 = vmatpush2.msra.mxu0 0.0
        %657 = vmatprep.subr.mxu0 0.0
        %658 = vmatpush2.msra.mxu0 0.0
        %659 = vmatprep.subr.mxu0 0.0
        %660 = vmatpush2.msra.mxu0 0.0
        %661 = vmatprep.subr.mxu0 0.0
        %662 = vmatpush2.msra.mxu0 0.0
        %663 = vmatprep.subr.mxu0 0.0
        %664 = vmatpush2.msra.mxu0 0.0
        %665 = vmatprep.subr.mxu0 0.0
        %666 = vmatpush2.msra.mxu0 0.0
        %667 = vmatprep.subr.mxu0 0.0
        %668 = vmatpush2.msra.mxu0 0.0
        %669 = vmatprep.mubr.f32.mxu0 0.0
        %670 = vmatmul.mubr.f32.gmra.mxu0 %v603
        %v671 = vpop.f32.mrf.mxu0
        %v672 = vadd.f32 0.0, %v671
        %v673 = vpop.f32.mrf.mxu0
        %674 = vdwg.mxu0
        %v675 = vsub.f32 %v460, %v672
        %v676 = vmul.f32 %v675, %v675
        %v677 = vsel %vm259, %v676, 0.0
        %678 = vadd.xlane.f32.xlu0 %v677
        %v679 = vpop.xlane.xlu0 %678
        %v680 = vadd.f32 %v465, %v679
        %s681 = scalar_lea.vmem %s1, 128
        %v682 = vld [vmem:[%s681] sm:$0xff]
        %v683 = vld [vmem:[%s681 + $0x8] sm:$0xff]
        %v684 = vld [vmem:[%s681 + $0x10] sm:$0xff]
        %v685 = vld [vmem:[%s681 + $0x18] sm:$0xff]
        %v686 = vld [vmem:[%s681 + $0x20] sm:$0xff]
        %v687 = vld [vmem:[%s681 + $0x28] sm:$0xff]
        %v688 = vld [vmem:[%s681 + $0x30] sm:$0xff]
        %v689 = vld [vmem:[%s681 + $0x38] sm:$0xff]
        %v690 = vld [vmem:[%s2 + $0x2] sm:$0x1]
        %v692 = vsel %vm259, %v675, 0
        %v695 = vsel %vm259, %v682, 0
        %v698 = vsel %vm259, %v683, 0
        %v701 = vsel %vm259, %v684, 0
        %v704 = vsel %vm259, %v685, 0
        %v707 = vsel %vm259, %v686, 0
        %v710 = vsel %vm259, %v687, 0
        %v713 = vsel %vm259, %v688, 0
        %v716 = vsel %vm259, %v689, 0
        %718 = vmatprep.subr.mxu0 0.0
        %719 = vmatpush1.xpose.msra.mxu0 0.0
        %720 = vmatprep.subr.mxu0 0.0
        %721 = vmatpush1.xpose.msra.mxu0 0.0
        %722 = vmatprep.subr.mxu0 0.0
        %723 = vmatpush1.xpose.msra.mxu0 0.0
        %724 = vmatprep.subr.mxu0 0.0
        %725 = vmatpush1.xpose.msra.mxu0 0.0
        %726 = vmatprep.subr.mxu0 0.0
        %727 = vmatpush1.xpose.msra.mxu0 0.0
        %728 = vmatprep.subr.mxu0 0.0
        %729 = vmatpush1.xpose.msra.mxu0 0.0
        %730 = vmatprep.subr.mxu0 0.0
        %731 = vmatpush1.xpose.msra.mxu0 0.0
        %732 = vmatprep.subr.mxu0 0.0
        %733 = vmatpush1.xpose.msra.mxu0 0.0
        %734 = vmatprep.subr.mxu0 0.0
        %735 = vmatpush1.xpose.msra.mxu0 %v716
        %736 = vmatprep.subr.mxu0 0.0
        %737 = vmatpush1.xpose.msra.mxu0 %v713
        %738 = vmatprep.subr.mxu0 0.0
        %739 = vmatpush1.xpose.msra.mxu0 %v710
        %740 = vmatprep.subr.mxu0 0.0
        %741 = vmatpush1.xpose.msra.mxu0 %v707
        %742 = vmatprep.subr.mxu0 0.0
        %743 = vmatpush1.xpose.msra.mxu0 %v704
        %744 = vmatprep.subr.mxu0 0.0
        %745 = vmatpush1.xpose.msra.mxu0 %v701
        %746 = vmatprep.subr.mxu0 0.0
        %747 = vmatpush1.xpose.msra.mxu0 %v698
        %748 = vmatprep.subr.mxu0 0.0
        %749 = vmatpush1.xpose.msra.mxu0 %v695
        %750 = vmatprep.subr.mxu0 0.0
        %751 = vmatpush2.xpose.msra.mxu0 0.0
        %752 = vmatprep.subr.mxu0 0.0
        %753 = vmatpush2.xpose.msra.mxu0 0.0
        %754 = vmatprep.subr.mxu0 0.0
        %755 = vmatpush2.xpose.msra.mxu0 0.0
        %756 = vmatprep.subr.mxu0 0.0
        %757 = vmatpush2.xpose.msra.mxu0 0.0
        %758 = vmatprep.subr.mxu0 0.0
        %759 = vmatpush2.xpose.msra.mxu0 0.0
        %760 = vmatprep.subr.mxu0 0.0
        %761 = vmatpush2.xpose.msra.mxu0 0.0
        %762 = vmatprep.subr.mxu0 0.0
        %763 = vmatpush2.xpose.msra.mxu0 0.0
        %764 = vmatprep.subr.mxu0 0.0
        %765 = vmatpush2.xpose.msra.mxu0 0.0
        %766 = vmatprep.subr.mxu0 0.0
        %767 = vmatpush2.xpose.msra.mxu0 0.0
        %768 = vmatprep.subr.mxu0 0.0
        %769 = vmatpush2.xpose.msra.mxu0 0.0
        %770 = vmatprep.subr.mxu0 0.0
        %771 = vmatpush2.xpose.msra.mxu0 0.0
        %772 = vmatprep.subr.mxu0 0.0
        %773 = vmatpush2.xpose.msra.mxu0 0.0
        %774 = vmatprep.subr.mxu0 0.0
        %775 = vmatpush2.xpose.msra.mxu0 0.0
        %776 = vmatprep.subr.mxu0 0.0
        %777 = vmatpush2.xpose.msra.mxu0 0.0
        %778 = vmatprep.subr.mxu0 0.0
        %779 = vmatpush2.xpose.msra.mxu0 0.0
        %780 = vmatprep.subr.mxu0 0.0
        %781 = vmatpush2.xpose.msra.mxu0 0.0
        %782 = vmatprep.mubr.f32.mxu0 0.0
        %783 = vmatmul.mubr.f32.gmra.mxu0 %v692
        %v784 = vpop.f32.mrf.mxu0
        %v785 = vadd.f32 0.0, %v784
        %v786 = vpop.f32.mrf.mxu0
        %787 = vdwg.mxu0
        %v788 = vmul.f32 %v785, 2.0
        %v789 = vlaneseq
        %v790 = vshrl.u32 %v789, 7
        %v791 = vsub.s32 0, %v790
        %v792 = vrot.slane %v690, %v791
        %v793 = vsub.f32 %v792, %v788
        %v794 = vsel %vm363, %v793, inf
        %795 = vmin.xlane.f32.xlu0 %v794
        %v796 = vpop.xlane.xlu0 %795
        %vm797 = vcmp.le.f32.partialorder %v793, %v796
        %v798 = vsel %vm797, %v249, 64
        %v799 = vsel %vm363, %v798, 2147483647
        %v800 = vand.u32 %v799, 65535
        %v801 = vshra.s32 %v799, 16
        %v802 = vcvt.s32.f32 %v800
        %v803 = vcvt.s32.f32 %v801
        %804 = vmin.xlane.f32.xlu0 %v803
        %v805 = vpop.xlane.xlu0 %804
        %vm806 = vcmp.eq.f32.partialorder %v803, %v805
        %v807 = vsel %vm806, %v802, inf
        %808 = vmin.xlane.f32.xlu0 %v807
        %v809 = vpop.xlane.xlu0 %808
        %v810 = vcvt.f32.s32 %v809
        %v811 = vcvt.f32.s32 %v805
        %v812 = vshll.u32 %v811, 16
        %v813 = vadd.s32 %v812, %v810
        %vm814 = vcmp.eq.s32.totalorder %v249, %v813
        %v815 = vsel %vm814, 1, 0
        %v816 = vcvt.s32.f32 %v815
        %v818 = vsel %vm363, %v816, 0
        %820 = vmatprep.subr.mxu0 0.0
        %821 = vmatpush1.msra.mxu0 0.0
        %822 = vmatprep.subr.mxu0 0.0
        %823 = vmatpush1.msra.mxu0 0.0
        %824 = vmatprep.subr.mxu0 0.0
        %825 = vmatpush1.msra.mxu0 0.0
        %826 = vmatprep.subr.mxu0 0.0
        %827 = vmatpush1.msra.mxu0 0.0
        %828 = vmatprep.subr.mxu0 0.0
        %829 = vmatpush1.msra.mxu0 0.0
        %830 = vmatprep.subr.mxu0 0.0
        %831 = vmatpush1.msra.mxu0 0.0
        %832 = vmatprep.subr.mxu0 0.0
        %833 = vmatpush1.msra.mxu0 0.0
        %834 = vmatprep.subr.mxu0 0.0
        %835 = vmatpush1.msra.mxu0 0.0
        %836 = vmatprep.subr.mxu0 0.0
        %837 = vmatpush1.msra.mxu0 %v689
        %838 = vmatprep.subr.mxu0 0.0
        %839 = vmatpush1.msra.mxu0 %v688
        %840 = vmatprep.subr.mxu0 0.0
        %841 = vmatpush1.msra.mxu0 %v687
        %842 = vmatprep.subr.mxu0 0.0
        %843 = vmatpush1.msra.mxu0 %v686
        %844 = vmatprep.subr.mxu0 0.0
        %845 = vmatpush1.msra.mxu0 %v685
        %846 = vmatprep.subr.mxu0 0.0
        %847 = vmatpush1.msra.mxu0 %v684
        %848 = vmatprep.subr.mxu0 0.0
        %849 = vmatpush1.msra.mxu0 %v683
        %850 = vmatprep.subr.mxu0 0.0
        %851 = vmatpush1.msra.mxu0 %v682
        %852 = vmatprep.subr.mxu0 0.0
        %853 = vmatpush2.msra.mxu0 0.0
        %854 = vmatprep.subr.mxu0 0.0
        %855 = vmatpush2.msra.mxu0 0.0
        %856 = vmatprep.subr.mxu0 0.0
        %857 = vmatpush2.msra.mxu0 0.0
        %858 = vmatprep.subr.mxu0 0.0
        %859 = vmatpush2.msra.mxu0 0.0
        %860 = vmatprep.subr.mxu0 0.0
        %861 = vmatpush2.msra.mxu0 0.0
        %862 = vmatprep.subr.mxu0 0.0
        %863 = vmatpush2.msra.mxu0 0.0
        %864 = vmatprep.subr.mxu0 0.0
        %865 = vmatpush2.msra.mxu0 0.0
        %866 = vmatprep.subr.mxu0 0.0
        %867 = vmatpush2.msra.mxu0 0.0
        %868 = vmatprep.subr.mxu0 0.0
        %869 = vmatpush2.msra.mxu0 0.0
        %870 = vmatprep.subr.mxu0 0.0
        %871 = vmatpush2.msra.mxu0 0.0
        %872 = vmatprep.subr.mxu0 0.0
        %873 = vmatpush2.msra.mxu0 0.0
        %874 = vmatprep.subr.mxu0 0.0
        %875 = vmatpush2.msra.mxu0 0.0
        %876 = vmatprep.subr.mxu0 0.0
        %877 = vmatpush2.msra.mxu0 0.0
        %878 = vmatprep.subr.mxu0 0.0
        %879 = vmatpush2.msra.mxu0 0.0
        %880 = vmatprep.subr.mxu0 0.0
        %881 = vmatpush2.msra.mxu0 0.0
        %882 = vmatprep.subr.mxu0 0.0
        %883 = vmatpush2.msra.mxu0 0.0
        %884 = vmatprep.mubr.f32.mxu0 0.0
        %885 = vmatmul.mubr.f32.gmra.mxu0 %v818
        %v886 = vpop.f32.mrf.mxu0
        %v887 = vadd.f32 0.0, %v886
        %v888 = vpop.f32.mrf.mxu0
        %889 = vdwg.mxu0
        %v890 = vsub.f32 %v675, %v887
        %v891 = vmul.f32 %v890, %v890
        %v892 = vsel %vm259, %v891, 0.0
        %893 = vadd.xlane.f32.xlu0 %v892
        %v894 = vpop.xlane.xlu0 %893
        %v895 = vadd.f32 %v680, %v894
        %s896 = scalar_lea.vmem %s1, 192
        %v897 = vld [vmem:[%s896] sm:$0xff]
        %v898 = vld [vmem:[%s896 + $0x8] sm:$0xff]
        %v899 = vld [vmem:[%s896 + $0x10] sm:$0xff]
        %v900 = vld [vmem:[%s896 + $0x18] sm:$0xff]
        %v901 = vld [vmem:[%s896 + $0x20] sm:$0xff]
        %v902 = vld [vmem:[%s896 + $0x28] sm:$0xff]
        %v903 = vld [vmem:[%s896 + $0x30] sm:$0xff]
        %v904 = vld [vmem:[%s896 + $0x38] sm:$0xff]
        %v905 = vld [vmem:[%s2 + $0x3] sm:$0x1]
        %v907 = vsel %vm259, %v890, 0
        %v910 = vsel %vm259, %v897, 0
        %v913 = vsel %vm259, %v898, 0
        %v916 = vsel %vm259, %v899, 0
        %v919 = vsel %vm259, %v900, 0
        %v922 = vsel %vm259, %v901, 0
        %v925 = vsel %vm259, %v902, 0
        %v928 = vsel %vm259, %v903, 0
        %v931 = vsel %vm259, %v904, 0
        %933 = vmatprep.subr.mxu0 0.0
        %934 = vmatpush1.xpose.msra.mxu0 0.0
        %935 = vmatprep.subr.mxu0 0.0
        %936 = vmatpush1.xpose.msra.mxu0 0.0
        %937 = vmatprep.subr.mxu0 0.0
        %938 = vmatpush1.xpose.msra.mxu0 0.0
        %939 = vmatprep.subr.mxu0 0.0
        %940 = vmatpush1.xpose.msra.mxu0 0.0
        %941 = vmatprep.subr.mxu0 0.0
        %942 = vmatpush1.xpose.msra.mxu0 0.0
        %943 = vmatprep.subr.mxu0 0.0
        %944 = vmatpush1.xpose.msra.mxu0 0.0
        %945 = vmatprep.subr.mxu0 0.0
        %946 = vmatpush1.xpose.msra.mxu0 0.0
        %947 = vmatprep.subr.mxu0 0.0
        %948 = vmatpush1.xpose.msra.mxu0 0.0
        %949 = vmatprep.subr.mxu0 0.0
        %950 = vmatpush1.xpose.msra.mxu0 %v931
        %951 = vmatprep.subr.mxu0 0.0
        %952 = vmatpush1.xpose.msra.mxu0 %v928
        %953 = vmatprep.subr.mxu0 0.0
        %954 = vmatpush1.xpose.msra.mxu0 %v925
        %955 = vmatprep.subr.mxu0 0.0
        %956 = vmatpush1.xpose.msra.mxu0 %v922
        %957 = vmatprep.subr.mxu0 0.0
        %958 = vmatpush1.xpose.msra.mxu0 %v919
        %959 = vmatprep.subr.mxu0 0.0
        %960 = vmatpush1.xpose.msra.mxu0 %v916
        %961 = vmatprep.subr.mxu0 0.0
        %962 = vmatpush1.xpose.msra.mxu0 %v913
        %963 = vmatprep.subr.mxu0 0.0
        %964 = vmatpush1.xpose.msra.mxu0 %v910
        %965 = vmatprep.subr.mxu0 0.0
        %966 = vmatpush2.xpose.msra.mxu0 0.0
        %967 = vmatprep.subr.mxu0 0.0
        %968 = vmatpush2.xpose.msra.mxu0 0.0
        %969 = vmatprep.subr.mxu0 0.0
        %970 = vmatpush2.xpose.msra.mxu0 0.0
        %971 = vmatprep.subr.mxu0 0.0
        %972 = vmatpush2.xpose.msra.mxu0 0.0
        %973 = vmatprep.subr.mxu0 0.0
        %974 = vmatpush2.xpose.msra.mxu0 0.0
        %975 = vmatprep.subr.mxu0 0.0
        %976 = vmatpush2.xpose.msra.mxu0 0.0
        %977 = vmatprep.subr.mxu0 0.0
        %978 = vmatpush2.xpose.msra.mxu0 0.0
        %979 = vmatprep.subr.mxu0 0.0
        %980 = vmatpush2.xpose.msra.mxu0 0.0
        %981 = vmatprep.subr.mxu0 0.0
        %982 = vmatpush2.xpose.msra.mxu0 0.0
        %983 = vmatprep.subr.mxu0 0.0
        %984 = vmatpush2.xpose.msra.mxu0 0.0
        %985 = vmatprep.subr.mxu0 0.0
        %986 = vmatpush2.xpose.msra.mxu0 0.0
        %987 = vmatprep.subr.mxu0 0.0
        %988 = vmatpush2.xpose.msra.mxu0 0.0
        %989 = vmatprep.subr.mxu0 0.0
        %990 = vmatpush2.xpose.msra.mxu0 0.0
        %991 = vmatprep.subr.mxu0 0.0
        %992 = vmatpush2.xpose.msra.mxu0 0.0
        %993 = vmatprep.subr.mxu0 0.0
        %994 = vmatpush2.xpose.msra.mxu0 0.0
        %995 = vmatprep.subr.mxu0 0.0
        %996 = vmatpush2.xpose.msra.mxu0 0.0
        %997 = vmatprep.mubr.f32.mxu0 0.0
        %998 = vmatmul.mubr.f32.gmra.mxu0 %v907
        %v999 = vpop.f32.mrf.mxu0
        %v1000 = vadd.f32 0.0, %v999
        %v1001 = vpop.f32.mrf.mxu0
        %1002 = vdwg.mxu0
        %v1003 = vmul.f32 %v1000, 2.0
        %v1004 = vlaneseq
        %v1005 = vshrl.u32 %v1004, 7
        %v1006 = vsub.s32 0, %v1005
        %v1007 = vrot.slane %v905, %v1006
        %v1008 = vsub.f32 %v1007, %v1003
        %v1009 = vsel %vm363, %v1008, inf
        %1010 = vmin.xlane.f32.xlu0 %v1009
        %v1011 = vpop.xlane.xlu0 %1010
        %vm1012 = vcmp.le.f32.partialorder %v1008, %v1011
        %v1013 = vsel %vm1012, %v249, 64
        %v1014 = vsel %vm363, %v1013, 2147483647
        %v1015 = vand.u32 %v1014, 65535
        %v1016 = vshra.s32 %v1014, 16
        %v1017 = vcvt.s32.f32 %v1015
        %v1018 = vcvt.s32.f32 %v1016
        %1019 = vmin.xlane.f32.xlu0 %v1018
        %v1020 = vpop.xlane.xlu0 %1019
        %vm1021 = vcmp.eq.f32.partialorder %v1018, %v1020
        %v1022 = vsel %vm1021, %v1017, inf
        %1023 = vmin.xlane.f32.xlu0 %v1022
        %v1024 = vpop.xlane.xlu0 %1023
        %v1025 = vcvt.f32.s32 %v1024
        %v1026 = vcvt.f32.s32 %v1020
        %v1027 = vshll.u32 %v1026, 16
        %v1028 = vadd.s32 %v1027, %v1025
        %vm1029 = vcmp.eq.s32.totalorder %v249, %v1028
        %v1030 = vsel %vm1029, 1, 0
        %v1031 = vcvt.s32.f32 %v1030
        %v1033 = vsel %vm363, %v1031, 0
        %1035 = vmatprep.subr.mxu0 0.0
        %1036 = vmatpush1.msra.mxu0 0.0
        %1037 = vmatprep.subr.mxu0 0.0
        %1038 = vmatpush1.msra.mxu0 0.0
        %1039 = vmatprep.subr.mxu0 0.0
        %1040 = vmatpush1.msra.mxu0 0.0
        %1041 = vmatprep.subr.mxu0 0.0
        %1042 = vmatpush1.msra.mxu0 0.0
        %1043 = vmatprep.subr.mxu0 0.0
        %1044 = vmatpush1.msra.mxu0 0.0
        %1045 = vmatprep.subr.mxu0 0.0
        %1046 = vmatpush1.msra.mxu0 0.0
        %1047 = vmatprep.subr.mxu0 0.0
        %1048 = vmatpush1.msra.mxu0 0.0
        %1049 = vmatprep.subr.mxu0 0.0
        %1050 = vmatpush1.msra.mxu0 0.0
        %1051 = vmatprep.subr.mxu0 0.0
        %1052 = vmatpush1.msra.mxu0 %v904
        %1053 = vmatprep.subr.mxu0 0.0
        %1054 = vmatpush1.msra.mxu0 %v903
        %1055 = vmatprep.subr.mxu0 0.0
        %1056 = vmatpush1.msra.mxu0 %v902
        %1057 = vmatprep.subr.mxu0 0.0
        %1058 = vmatpush1.msra.mxu0 %v901
        %1059 = vmatprep.subr.mxu0 0.0
        %1060 = vmatpush1.msra.mxu0 %v900
        %1061 = vmatprep.subr.mxu0 0.0
        %1062 = vmatpush1.msra.mxu0 %v899
        %1063 = vmatprep.subr.mxu0 0.0
        %1064 = vmatpush1.msra.mxu0 %v898
        %1065 = vmatprep.subr.mxu0 0.0
        %1066 = vmatpush1.msra.mxu0 %v897
        %1067 = vmatprep.subr.mxu0 0.0
        %1068 = vmatpush2.msra.mxu0 0.0
        %1069 = vmatprep.subr.mxu0 0.0
        %1070 = vmatpush2.msra.mxu0 0.0
        %1071 = vmatprep.subr.mxu0 0.0
        %1072 = vmatpush2.msra.mxu0 0.0
        %1073 = vmatprep.subr.mxu0 0.0
        %1074 = vmatpush2.msra.mxu0 0.0
        %1075 = vmatprep.subr.mxu0 0.0
        %1076 = vmatpush2.msra.mxu0 0.0
        %1077 = vmatprep.subr.mxu0 0.0
        %1078 = vmatpush2.msra.mxu0 0.0
        %1079 = vmatprep.subr.mxu0 0.0
        %1080 = vmatpush2.msra.mxu0 0.0
        %1081 = vmatprep.subr.mxu0 0.0
        %1082 = vmatpush2.msra.mxu0 0.0
        %1083 = vmatprep.subr.mxu0 0.0
        %1084 = vmatpush2.msra.mxu0 0.0
        %1085 = vmatprep.subr.mxu0 0.0
        %1086 = vmatpush2.msra.mxu0 0.0
        %1087 = vmatprep.subr.mxu0 0.0
        %1088 = vmatpush2.msra.mxu0 0.0
        %1089 = vmatprep.subr.mxu0 0.0
        %1090 = vmatpush2.msra.mxu0 0.0
        %1091 = vmatprep.subr.mxu0 0.0
        %1092 = vmatpush2.msra.mxu0 0.0
        %1093 = vmatprep.subr.mxu0 0.0
        %1094 = vmatpush2.msra.mxu0 0.0
        %1095 = vmatprep.subr.mxu0 0.0
        %1096 = vmatpush2.msra.mxu0 0.0
        %1097 = vmatprep.subr.mxu0 0.0
        %1098 = vmatpush2.msra.mxu0 0.0
        %1099 = vmatprep.mubr.f32.mxu0 0.0
        %1100 = vmatmul.mubr.f32.gmra.mxu0 %v1033
        %v1101 = vpop.f32.mrf.mxu0
        %v1102 = vadd.f32 0.0, %v1101
        %v1103 = vpop.f32.mrf.mxu0
        %1104 = vdwg.mxu0
        %v1105 = vsub.f32 %v890, %v1102
        %v1106 = vmul.f32 %v1105, %v1105
        %v1107 = vsel %vm259, %v1106, 0.0
        %1108 = vadd.xlane.f32.xlu0 %v1107
        %v1109 = vpop.xlane.xlu0 %1108
        %v1110 = vadd.f32 %v895, %v1109
        %v1111 = vsub.f32 %v241, %v1105
        %1112 = vst.msk [vmem:[%s219] sm:$0xff] %vm259, %v1111
        %vm1113 = vcmask 7168
        %v1114 = vsel %vm1113, %v383, %v598
        %vm1115 = vcmask 15360
        %v1116 = vsel %vm1115, %v1114, %v813
        %vm1117 = vcmask 23552
        %v1118 = vsel %vm1117, %v1116, %v1028
        %vm1119 = vcmask 31744
        %1120 = vst.msk [vmem:[%s240] sm:$0xff] %vm1119, %v1118
        %v1121 = vsel %vm247, %v1110, 0.0
        %v1122 = vsel %vm1113, %v1121, 0.0
        %1123 = vadd.xlane.f32.xlu0 %v1122
        %v1124 = vpop.xlane.xlu0 %1123
        %v1125 = vrot.slane %v1124, 4
        %v1126 = vadd.f32 %v1124, %v1125
        %v1127 = vrot.slane %v1126, 2
        %v1128 = vadd.f32 %v1126, %v1127
        %v1129 = vrot.slane %v1128, 1
        %v1130 = vadd.f32 %v1128, %v1129
        %s1131 = vtos %v1130
        %v1132 = vstv %s1131
        %1133 = vst [vmem:[%s232] sm:$0xff] %v1132
        %s1134 = sand.u32 %s99, 1
        %s1135 = scalar_lea.sflag [#allocation3], %s1134
        %s1136 = sand.u32 %s99, 1
        %s1137 = smul.addr %s1136, 8
        %s1138 = scalar_lea.vmem [#allocation2], %s1137
        %p1139 = scmp.lt.s32.totalorder %s23, 1
        %s1140 = scalar_select %p1139, %s23, 1
        %s1141 = smul.addr %s1140, 8
        %s1142 = scalar_lea.vmem %s4, %s1141
        %s1143 = sand.u32 %s151, 1
        %s1144 = scalar_lea.sflag [#allocation5], %s1143
        %s1145 = sand.u32 %s151, 1
        %s1146 = smul.addr %s1145, 8
        %s1147 = scalar_lea.vmem [#allocation4], %s1146
        // Predicated region
        $region33: #{tpu_custom_call.1} parent=31 // pred_check
          %p1148 = pneg %p109
        $region34: #{tpu_custom_call.1} parent=31 // pred_check_branch
          %1150 = sbr.rel (%p1148) target = $region36
        $region35: #{tpu_custom_call.1} parent=31 // pred_region
          %s1152 = ssub.s32 128, 128
          %1153 = vsyncadd %s1135, %s1152
          %s1154 = smul.addr %s23, 128
          %s1155 = scalar_lea.hbm %s3, %s1154
          %s1157 = sshll.u32 %s1138, 4
          %s1158 = int_to_ptr.vmem [resolvable:$true] %s1157
          %1160 = dma.vmem_to_hbm [thread:$0]  %s1158, 128, %s1155, %s1135
        $region36: #{tpu_custom_call.1} parent=31 // pred_fallthru
          _
        // Predicated region
        $region37: #{tpu_custom_call.1} parent=31 // pred_check
          %p1161 = pneg %p135
        $region38: #{tpu_custom_call.1} parent=31 // pred_check_branch
          %1163 = sbr.rel (%p1161) target = $region40
        $region39: #{tpu_custom_call.1} parent=31 // pred_region
          _
        $region40: #{tpu_custom_call.1} parent=31 // pred_fallthru
          _
        // Predicated region
        $region41: #{tpu_custom_call.1} parent=31 // pred_check
          %p1164 = pneg %p161
        $region42: #{tpu_custom_call.1} parent=31 // pred_check_branch
          %1166 = sbr.rel (%p1164) target = $region44
        $region43: #{tpu_custom_call.1} parent=31 // pred_region
          %s1168 = ssub.s32 128, 128
          %1169 = vsyncadd %s1144, %s1168
          %s1170 = smul.addr %s23, 128
          %s1171 = scalar_lea.hbm %s5, %s1170
          %s1173 = sshll.u32 %s1147, 4
          %s1174 = int_to_ptr.vmem [resolvable:$true] %s1173
          %1176 = dma.vmem_to_hbm [thread:$0]  %s1174, 128, %s1171, %s1144
        $region44: #{tpu_custom_call.1} parent=31 // pred_fallthru
          _
      $region32: #{tpu_custom_call.1} parent=5 // pred_fallthru
        _
      %p1177 = scmp.le.s32.totalorder 2, %s18
      // Predicated region
      $region45: #{tpu_custom_call.1} parent=5 // pred_check
        %p1178 = pneg %p1177
      $region46: #{tpu_custom_call.1} parent=5 // pred_check_branch
        %1180 = sbr.rel (%p1178) target = $region48
      $region47: #{tpu_custom_call.1} parent=5 // pred_region
        %s1181 = ssub.s32 %s18, 2
        // Predicated region
        $region49: #{tpu_custom_call.1} parent=47 // pred_check
          %p1182 = pneg %p115
        $region50: #{tpu_custom_call.1} parent=47 // pred_check_branch
          %1184 = sbr.rel (%p1182) target = $region52
        $region51: #{tpu_custom_call.1} parent=47 // pred_region
          %s1185 = sand.u32 %s100, 1
          %s1186 = scalar_lea.sflag [#allocation3], %s1185
          %s1187 = sand.u32 %s100, 1
          %s1188 = smul.addr %s1187, 8
          %s1189 = scalar_lea.vmem [#allocation2], %s1188
          %1190 = dma.done %s1186, 128
        $region52: #{tpu_custom_call.1} parent=47 // pred_fallthru
          _
        // Predicated region
        $region53: #{tpu_custom_call.1} parent=47 // pred_check
          %p1191 = pneg %p141
        $region54: #{tpu_custom_call.1} parent=47 // pred_check_branch
          %1193 = sbr.rel (%p1191) target = $region56
        $region55: #{tpu_custom_call.1} parent=47 // pred_region
          %p1194 = scmp.lt.s32.totalorder %s24, 1
          %s1195 = scalar_select %p1194, %s24, 1
          %s1196 = smul.addr %s1195, 8
          %s1197 = scalar_lea.vmem %s4, %s1196
        $region56: #{tpu_custom_call.1} parent=47 // pred_fallthru
          _
        // Predicated region
        $region57: #{tpu_custom_call.1} parent=47 // pred_check
          %p1198 = pneg %p167
        $region58: #{tpu_custom_call.1} parent=47 // pred_check_branch
          %1200 = sbr.rel (%p1198) target = $region60
        $region59: #{tpu_custom_call.1} parent=47 // pred_region
          %s1201 = sand.u32 %s152, 1
          %s1202 = scalar_lea.sflag [#allocation5], %s1201
          %s1203 = sand.u32 %s152, 1
          %s1204 = smul.addr %s1203, 8
          %s1205 = scalar_lea.vmem [#allocation4], %s1204
          %1206 = dma.done %s1202, 128
        $region60: #{tpu_custom_call.1} parent=47 // pred_fallthru
          _
      $region48: #{tpu_custom_call.1} parent=5 // pred_fallthru
        _
    $region6: #{tpu_custom_call.1} parent=1 // loop_footer
      %s22 = sadd.s32 1, %s18
    $region7: #{tpu_custom_call.1} parent=1 // loop_footer_branch
      %17 = sbr.rel target = $region3
    $region8: #{tpu_custom_call.1} parent=1 // loop_exit
      _
    %1207 = vsyncpa [#allocation3], 1
    %s1208 = scalar_lea.sflag [#allocation3], 1
    %1209 = vsyncpa %s1208, 1
    %1210 = vsyncpa [#allocation5], 1
    %s1211 = scalar_lea.sflag [#allocation5], 1
    %1212 = vsyncpa %s1211, 1

// kernel: tpu_custom_call.1
$region0: #{tpu_custom_call.1}
  #allocation0 [shape = 'u32[]', space=smem, size = 0x4, offset = 0x4, fixed_abs, tag = 'smem constant byte address 0x4 - core index']
  #allocation1 [shape = 'u32[144,128]{1,0:T(1,128)}', space=vmem, size = 0x12000, scoped, tag = 'internal scratch']
  %s0 = inlined_call_operand.vmem [shape: f32[16,32], index: 0, kind: input, shape index: {}]
  %s1 = inlined_call_operand.vmem [shape: f32[4,64,32], index: 1, kind: input, shape index: {}]
  %s2 = inlined_call_operand.vmem [shape: f32[4,64], index: 2, kind: input, shape index: {}]
  %s3 = inlined_call_operand.hbm [shape: f32[16,32], index: 3, kind: output, shape index: {0}]
  %s4 = inlined_call_operand.vmem [shape: s32[16,4], index: 4, kind: output, shape index: {1}]
  %s5 = inlined_call_operand.hbm [shape: f32[2,8,128], index: 5, kind: output, shape index: {2}]
  %6 = xla_tuple %s3, %s4, %s5
  %s7 = sld [smem:[#allocation0]]
  $region61: #{tpu_custom_call.1} parent=0
    _
  %s9 = ssub.s32 1, %s7
  %s10 = scalar_select 0, %s9, %s7
  $region1: #{tpu_custom_call.1} parent=0
    #allocation2 [shape = 'u8[8192]{0}', space=vmem, size = 0x2000, scoped, tag = 'output window, operand 0']
    #allocation3 [shape = 's32[2]{0}', space=sflag, size = 0x8, scoped, tag = 'scoped memory for tpu_custom_call.1']
    #allocation4 [shape = 'u8[8192]{0}', space=vmem, size = 0x2000, scoped, tag = 'output window, operand 2']
    #allocation5 [shape = 's32[2]{0}', space=sflag, size = 0x8, scoped, tag = 'scoped memory for tpu_custom_call.1']
    %11 = vsyncpa [#allocation3], 0
    %s12 = scalar_lea.sflag [#allocation3], 1
    %13 = vsyncpa %s12, 0
    %14 = vsyncpa [#allocation5], 0
    %s15 = scalar_lea.sflag [#allocation5], 1
    %16 = vsyncpa %s15, 0
    loop: start=0, step=1, limit=4
    $region2: #{tpu_custom_call.1} parent=1 // loop_pre_header
      _
    $region3: #{tpu_custom_call.1} parent=1 // loop_header
      %s18 = sphi 0, %s22
      %p19 = scmp.ge.s32.totalorder %s18, 4
      %s28 = sphi 0, %s30
      %s31 = sphi 0, %s28
      %s32 = sphi 0, %s31
      %s48 = sphi 0, %s32
      %s52 = sphi 0, %s52
      %s54 = sphi 0, %s52
      %s55 = sphi 0, %s54
      %s69 = sphi 0, %s55
      %s73 = sphi 0, %s73
      %s75 = sphi 0, %s73
      %s76 = sphi 0, %s75
      %s90 = sphi 0, %s76
      %s96 = sphi 0, %s98
      %s99 = sphi 0, %s96
      %s100 = sphi 0, %s99
      %s116 = sphi 0, %s100
      %s122 = sphi 0, %s124
      %s125 = sphi 0, %s122
      %s126 = sphi 0, %s125
      %s142 = sphi 0, %s126
      %s148 = sphi 0, %s150
      %s151 = sphi 0, %s148
      %s152 = sphi 0, %s151
      %s168 = sphi 0, %s152
    $region4: #{tpu_custom_call.1} parent=1 // loop_header_branch
      %21 = sbr.rel (%p19) target = $region8
    $region5: #{tpu_custom_call.1} parent=1 // loop_body
      %s23 = ssub.s32 %s18, 1
      %s24 = ssub.s32 %s18, 2
      %s25 = sadd.s32 %s18, 1
      %s26 = ssub.s32 %s18, %s25
      %p27 = scmp.eq.s32.totalorder %s26, 0
      %s29 = sadd.s32 %s28, 1
      %s30 = scalar_select %p27, %s28, %s29
      %p33 = pneg %p27
      %p34 = scmp.eq.s32.totalorder %s18, 1
      %p35 = por %p33, %p34
      %p36 = scmp.ne.s32.totalorder %s28, %s31
      %p37 = scmp.eq.s32.totalorder %s18, 0
      %p38 = por %p36, %p37
      %p39 = scmp.ne.s32.totalorder %s28, %s31
      %p40 = scmp.eq.s32.totalorder %s23, 1
      %p41 = por %p39, %p40
      %p42 = scmp.ne.s32.totalorder %s31, %s32
      %p43 = scmp.eq.s32.totalorder %s23, 0
      %p44 = por %p42, %p43
      %p45 = scmp.ne.s32.totalorder %s31, %s32
      %p46 = scmp.eq.s32.totalorder %s24, 1
      %p47 = por %p45, %p46
      %p49 = scmp.ne.s32.totalorder %s32, %s48
      %p50 = scmp.eq.s32.totalorder %s24, 0
      %p51 = por %p49, %p50
      %s53 = sadd.s32 %s52, 1
      %p56 = scmp.eq.s32.totalorder %s18, 1
      %p57 = scmp.ne.s32.totalorder %s52, %s54
      %p58 = scmp.eq.s32.totalorder %s18, 0
      %p59 = por %p57, %p58
      %p60 = scmp.ne.s32.totalorder %s52, %s54
      %p61 = scmp.eq.s32.totalorder %s23, 1
      %p62 = por %p60, %p61
      %p63 = scmp.ne.s32.totalorder %s54, %s55
      %p64 = scmp.eq.s32.totalorder %s23, 0
      %p65 = por %p63, %p64
      %p66 = scmp.ne.s32.totalorder %s54, %s55
      %p67 = scmp.eq.s32.totalorder %s24, 1
      %p68 = por %p66, %p67
      %p70 = scmp.ne.s32.totalorder %s55, %s69
      %p71 = scmp.eq.s32.totalorder %s24, 0
      %p72 = por %p70, %p71
      %s74 = sadd.s32 %s73, 1
      %p77 = scmp.eq.s32.totalorder %s18, 1
      %p78 = scmp.ne.s32.totalorder %s73, %s75
      %p79 = scmp.eq.s32.totalorder %s18, 0
      %p80 = por %p78, %p79
      %p81 = scmp.ne.s32.totalorder %s73, %s75
      %p82 = scmp.eq.s32.totalorder %s23, 1
      %p83 = por %p81, %p82
      %p84 = scmp.ne.s32.totalorder %s75, %s76
      %p85 = scmp.eq.s32.totalorder %s23, 0
      %p86 = por %p84, %p85
      %p87 = scmp.ne.s32.totalorder %s75, %s76
      %p88 = scmp.eq.s32.totalorder %s24, 1
      %p89 = por %p87, %p88
      %p91 = scmp.ne.s32.totalorder %s76, %s90
      %p92 = scmp.eq.s32.totalorder %s24, 0
      %p93 = por %p91, %p92
      %s94 = ssub.s32 %s18, %s25
      %p95 = scmp.eq.s32.totalorder %s94, 0
      %s97 = sadd.s32 %s96, 1
      %s98 = scalar_select %p95, %s96, %s97
      %p101 = pneg %p95
      %p102 = scmp.eq.s32.totalorder %s18, 1
      %p103 = por %p101, %p102
      %p104 = scmp.ne.s32.totalorder %s96, %s99
      %p105 = scmp.eq.s32.totalorder %s18, 0
      %p106 = por %p104, %p105
      %p107 = scmp.ne.s32.totalorder %s96, %s99
      %p108 = scmp.eq.s32.totalorder %s23, 1
      %p109 = por %p107, %p108
      %p110 = scmp.ne.s32.totalorder %s99, %s100
      %p111 = scmp.eq.s32.totalorder %s23, 0
      %p112 = por %p110, %p111
      %p113 = scmp.ne.s32.totalorder %s99, %s100
      %p114 = scmp.eq.s32.totalorder %s24, 1
      %p115 = por %p113, %p114
      %p117 = scmp.ne.s32.totalorder %s100, %s116
      %p118 = scmp.eq.s32.totalorder %s24, 0
      %p119 = por %p117, %p118
      %s120 = ssub.s32 %s18, %s25
      %p121 = scmp.eq.s32.totalorder %s120, 0
      %s123 = sadd.s32 %s122, 1
      %s124 = scalar_select %p121, %s122, %s123
      %p127 = pneg %p121
      %p128 = scmp.eq.s32.totalorder %s18, 1
      %p129 = por %p127, %p128
      %p130 = scmp.ne.s32.totalorder %s122, %s125
      %p131 = scmp.eq.s32.totalorder %s18, 0
      %p132 = por %p130, %p131
      %p133 = scmp.ne.s32.totalorder %s122, %s125
      %p134 = scmp.eq.s32.totalorder %s23, 1
      %p135 = por %p133, %p134
      %p136 = scmp.ne.s32.totalorder %s125, %s126
      %p137 = scmp.eq.s32.totalorder %s23, 0
      %p138 = por %p136, %p137
      %p139 = scmp.ne.s32.totalorder %s125, %s126
      %p140 = scmp.eq.s32.totalorder %s24, 1
      %p141 = por %p139, %p140
      %p143 = scmp.ne.s32.totalorder %s126, %s142
      %p144 = scmp.eq.s32.totalorder %s24, 0
      %p145 = por %p143, %p144
      %s146 = ssub.s32 %s18, %s25
      %p147 = scmp.eq.s32.totalorder %s146, 0
      %s149 = sadd.s32 %s148, 1
      %s150 = scalar_select %p147, %s148, %s149
      %p153 = pneg %p147
      %p154 = scmp.eq.s32.totalorder %s18, 1
      %p155 = por %p153, %p154
      %p156 = scmp.ne.s32.totalorder %s148, %s151
      %p157 = scmp.eq.s32.totalorder %s18, 0
      %p158 = por %p156, %p157
      %p159 = scmp.ne.s32.totalorder %s148, %s151
      %p160 = scmp.eq.s32.totalorder %s23, 1
      %p161 = por %p159, %p160
      %p162 = scmp.ne.s32.totalorder %s151, %s152
      %p163 = scmp.eq.s32.totalorder %s23, 0
      %p164 = por %p162, %p163
      %p165 = scmp.ne.s32.totalorder %s151, %s152
      %p166 = scmp.eq.s32.totalorder %s24, 1
      %p167 = por %p165, %p166
      %p169 = scmp.ne.s32.totalorder %s152, %s168
      %p170 = scmp.eq.s32.totalorder %s24, 0
      %p171 = por %p169, %p170
      %p172 = scmp.le.s32.totalorder 1, %s18
      %p173 = scmp.lt.s32.totalorder %s18, 3
      %p174 = pnand %p172, %p173
      %p175 = pneg %p174
      // Predicated region
      $region9: #{tpu_custom_call.1} parent=5 // pred_check
        _
      $region10: #{tpu_custom_call.1} parent=5 // pred_check_branch
        %177 = sbr.rel (%p174) target = $region12
      $region11: #{tpu_custom_call.1} parent=5 // pred_region
        %s178 = ssub.s32 %s18, 1
        // Predicated region
        $region13: #{tpu_custom_call.1} parent=11 // pred_check
          %p179 = pneg %p65
        $region14: #{tpu_custom_call.1} parent=11 // pred_check_branch
          %181 = sbr.rel (%p179) target = $region16
        $region15: #{tpu_custom_call.1} parent=11 // pred_region
          _
        $region16: #{tpu_custom_call.1} parent=11 // pred_fallthru
          _
        // Predicated region
        $region17: #{tpu_custom_call.1} parent=11 // pred_check
          %p182 = pneg %p86
        $region18: #{tpu_custom_call.1} parent=11 // pred_check_branch
          %184 = sbr.rel (%p182) target = $region20
        $region19: #{tpu_custom_call.1} parent=11 // pred_region
          _
        $region20: #{tpu_custom_call.1} parent=11 // pred_fallthru
          _
      $region12: #{tpu_custom_call.1} parent=5 // pred_fallthru
        _
      %p185 = scmp.lt.s32.totalorder %s18, 2
      // Predicated region
      $region21: #{tpu_custom_call.1} parent=5 // pred_check
        %p186 = pneg %p185
      $region22: #{tpu_custom_call.1} parent=5 // pred_check_branch
        %188 = sbr.rel (%p186) target = $region24
      $region23: #{tpu_custom_call.1} parent=5 // pred_region
        // Predicated region
        $region25: #{tpu_custom_call.1} parent=23 // pred_check
          %p189 = pneg %p38
        $region26: #{tpu_custom_call.1} parent=23 // pred_check_branch
          %191 = sbr.rel (%p189) target = $region28
        $region27: #{tpu_custom_call.1} parent=23 // pred_region
          %p192 = scmp.lt.s32.totalorder %s18, 1
          %s193 = scalar_select %p192, %s18, 1
          %s194 = smul.addr %s193, 8
          %s195 = scalar_lea.vmem %s0, %s194
        $region28: #{tpu_custom_call.1} parent=23 // pred_fallthru
          _
      $region24: #{tpu_custom_call.1} parent=5 // pred_fallthru
        _
      %p196 = scmp.le.s32.totalorder 1, %s18
      %p197 = scmp.lt.s32.totalorder %s18, 3
      %p198 = pnand %p196, %p197
      %p199 = pneg %p198
      // Predicated region
      $region29: #{tpu_custom_call.1} parent=5 // pred_check
        _
      $region30: #{tpu_custom_call.1} parent=5 // pred_check_branch
        %201 = sbr.rel (%p198) target = $region32
      $region31: #{tpu_custom_call.1} parent=5 // pred_region
        %s202 = ssub.s32 %s18, 1
        %p203 = scmp.lt.s32.totalorder %s23, 1
        %s204 = scalar_select %p203, %s23, 1
        %s205 = smul.addr %s204, 8
        %s206 = scalar_lea.vmem %s0, %s205
        %p207 = pneg %p44
        %p208 = pneg %p41
        %p209 = pneg %p65
        %p210 = pneg %p62
        %p211 = pneg %p86
        %p212 = pneg %p83
        %p213 = pneg %p112
        %p214 = pneg %p109
        %s215 = sand.u32 %s99, 1
        %s216 = scalar_lea.sflag [#allocation3], %s215
        %s217 = sand.u32 %s99, 1
        %s218 = smul.addr %s217, 8
        %s219 = scalar_lea.vmem [#allocation2], %s218
        %p220 = pneg %p138
        %p221 = pneg %p135
        %p222 = scmp.lt.s32.totalorder %s23, 1
        %s223 = scalar_select %p222, %s23, 1
        %s224 = smul.addr %s223, 8
        %s225 = scalar_lea.vmem %s4, %s224
        %p226 = pneg %p164
        %p227 = pneg %p161
        %s228 = sand.u32 %s151, 1
        %s229 = scalar_lea.sflag [#allocation5], %s228
        %s230 = sand.u32 %s151, 1
        %s231 = smul.addr %s230, 8
        %s232 = scalar_lea.vmem [#allocation4], %s231
        %p233 = scmp.lt.s32.totalorder %s23, 1
        %s234 = scalar_select %p233, %s23, 1
        %s235 = smul.addr %s234, 8
        %s236 = scalar_lea.vmem %s0, %s235
        %p237 = scmp.lt.s32.totalorder %s23, 1
        %s238 = scalar_select %p237, %s23, 1
        %s239 = smul.addr %s238, 8
        %s240 = scalar_lea.vmem %s4, %s239
        %v241 = vld [vmem:[%s236] sm:$0xff]
        %s242 = smul.u32 %s23, 8
        %v243 = vlaneseq
        %v244 = vshrl.u32 %v243, 7
        %v245 = vstv %s242
        %v246 = vadd.s32 %v245, %v244
        %vm247 = vcmp.lt.s32.totalorder %v246, 16
        %v248 = vlaneseq
        %v249 = vand.u32 %v248, 127
        %v250 = vld [vmem:[%s1] sm:$0xff]
        %v251 = vld [vmem:[%s1 + $0x8] sm:$0xff]
        %v252 = vld [vmem:[%s1 + $0x10] sm:$0xff]
        %v253 = vld [vmem:[%s1 + $0x18] sm:$0xff]
        %v254 = vld [vmem:[%s1 + $0x20] sm:$0xff]
        %v255 = vld [vmem:[%s1 + $0x28] sm:$0xff]
        %v256 = vld [vmem:[%s1 + $0x30] sm:$0xff]
        %v257 = vld [vmem:[%s1 + $0x38] sm:$0xff]
        %v258 = vld [vmem:[%s2] sm:$0x1]
        %vm259 = vcmask 261120
        %v261 = vsel %vm259, %v241, 0
        %v264 = vsel %vm259, %v250, 0
        %v267 = vsel %vm259, %v251, 0
        %v270 = vsel %vm259, %v252, 0
        %v273 = vsel %vm259, %v253, 0
        %v276 = vsel %vm259, %v254, 0
        %v279 = vsel %vm259, %v255, 0
        %v282 = vsel %vm259, %v256, 0
        %v285 = vsel %vm259, %v257, 0
        %287 = vmatprep.subr.mxu0 0.0
        %288 = vmatpush1.xpose.msra.mxu0 0.0
        %289 = vmatprep.subr.mxu0 0.0
        %290 = vmatpush1.xpose.msra.mxu0 0.0
        %291 = vmatprep.subr.mxu0 0.0
        %292 = vmatpush1.xpose.msra.mxu0 0.0
        %293 = vmatprep.subr.mxu0 0.0
        %294 = vmatpush1.xpose.msra.mxu0 0.0
        %295 = vmatprep.subr.mxu0 0.0
        %296 = vmatpush1.xpose.msra.mxu0 0.0
        %297 = vmatprep.subr.mxu0 0.0
        %298 = vmatpush1.xpose.msra.mxu0 0.0
        %299 = vmatprep.subr.mxu0 0.0
        %300 = vmatpush1.xpose.msra.mxu0 0.0
        %301 = vmatprep.subr.mxu0 0.0
        %302 = vmatpush1.xpose.msra.mxu0 0.0
        %303 = vmatprep.subr.mxu0 0.0
        %304 = vmatpush1.xpose.msra.mxu0 %v285
        %305 = vmatprep.subr.mxu0 0.0
        %306 = vmatpush1.xpose.msra.mxu0 %v282
        %307 = vmatprep.subr.mxu0 0.0
        %308 = vmatpush1.xpose.msra.mxu0 %v279
        %309 = vmatprep.subr.mxu0 0.0
        %310 = vmatpush1.xpose.msra.mxu0 %v276
        %311 = vmatprep.subr.mxu0 0.0
        %312 = vmatpush1.xpose.msra.mxu0 %v273
        %313 = vmatprep.subr.mxu0 0.0
        %314 = vmatpush1.xpose.msra.mxu0 %v270
        %315 = vmatprep.subr.mxu0 0.0
        %316 = vmatpush1.xpose.msra.mxu0 %v267
        %317 = vmatprep.subr.mxu0 0.0
        %318 = vmatpush1.xpose.msra.mxu0 %v264
        %319 = vmatprep.subr.mxu0 0.0
        %320 = vmatpush2.xpose.msra.mxu0 0.0
        %321 = vmatprep.subr.mxu0 0.0
        %322 = vmatpush2.xpose.msra.mxu0 0.0
        %323 = vmatprep.subr.mxu0 0.0
        %324 = vmatpush2.xpose.msra.mxu0 0.0
        %325 = vmatprep.subr.mxu0 0.0
        %326 = vmatpush2.xpose.msra.mxu0 0.0
        %327 = vmatprep.subr.mxu0 0.0
        %328 = vmatpush2.xpose.msra.mxu0 0.0
        %329 = vmatprep.subr.mxu0 0.0
        %330 = vmatpush2.xpose.msra.mxu0 0.0
        %331 = vmatprep.subr.mxu0 0.0
        %332 = vmatpush2.xpose.msra.mxu0 0.0
        %333 = vmatprep.subr.mxu0 0.0
        %334 = vmatpush2.xpose.msra.mxu0 0.0
        %335 = vmatprep.subr.mxu0 0.0
        %336 = vmatpush2.xpose.msra.mxu0 0.0
        %337 = vmatprep.subr.mxu0 0.0
        %338 = vmatpush2.xpose.msra.mxu0 0.0
        %339 = vmatprep.subr.mxu0 0.0
        %340 = vmatpush2.xpose.msra.mxu0 0.0
        %341 = vmatprep.subr.mxu0 0.0
        %342 = vmatpush2.xpose.msra.mxu0 0.0
        %343 = vmatprep.subr.mxu0 0.0
        %344 = vmatpush2.xpose.msra.mxu0 0.0
        %345 = vmatprep.subr.mxu0 0.0
        %346 = vmatpush2.xpose.msra.mxu0 0.0
        %347 = vmatprep.subr.mxu0 0.0
        %348 = vmatpush2.xpose.msra.mxu0 0.0
        %349 = vmatprep.subr.mxu0 0.0
        %350 = vmatpush2.xpose.msra.mxu0 0.0
        %351 = vmatprep.mubr.f32.mxu0 0.0
        %352 = vmatmul.mubr.f32.gmra.mxu0 %v261
        %v353 = vpop.f32.mrf.mxu0
        %v354 = vadd.f32 0.0, %v353
        %v355 = vpop.f32.mrf.mxu0
        %356 = vdwg.mxu0
        %v357 = vmul.f32 %v354, 2.0
        %v358 = vlaneseq
        %v359 = vshrl.u32 %v358, 7
        %v360 = vsub.s32 0, %v359
        %v361 = vrot.slane %v258, %v360
        %v362 = vsub.f32 %v361, %v357
        %vm363 = vcmask 523264
        %v364 = vsel %vm363, %v362, inf
        %365 = vmin.xlane.f32.xlu0 %v364
        %v366 = vpop.xlane.xlu0 %365
        %vm367 = vcmp.le.f32.partialorder %v362, %v366
        %v368 = vsel %vm367, %v249, 64
        %v369 = vsel %vm363, %v368, 2147483647
        %v370 = vand.u32 %v369, 65535
        %v371 = vshra.s32 %v369, 16
        %v372 = vcvt.s32.f32 %v370
        %v373 = vcvt.s32.f32 %v371
        %374 = vmin.xlane.f32.xlu0 %v373
        %v375 = vpop.xlane.xlu0 %374
        %vm376 = vcmp.eq.f32.partialorder %v373, %v375
        %v377 = vsel %vm376, %v372, inf
        %378 = vmin.xlane.f32.xlu0 %v377
        %v379 = vpop.xlane.xlu0 %378
        %v380 = vcvt.f32.s32 %v379
        %v381 = vcvt.f32.s32 %v375
        %v382 = vshll.u32 %v381, 16
        %v383 = vadd.s32 %v382, %v380
        %vm384 = vcmp.eq.s32.totalorder %v249, %v383
        %v385 = vsel %vm384, 1, 0
        %v386 = vcvt.s32.f32 %v385
        %v388 = vsel %vm363, %v386, 0
        %390 = vmatprep.subr.mxu0 0.0
        %391 = vmatpush1.msra.mxu0 0.0
        %392 = vmatprep.subr.mxu0 0.0
        %393 = vmatpush1.msra.mxu0 0.0
        %394 = vmatprep.subr.mxu0 0.0
        %395 = vmatpush1.msra.mxu0 0.0
        %396 = vmatprep.subr.mxu0 0.0
        %397 = vmatpush1.msra.mxu0 0.0
        %398 = vmatprep.subr.mxu0 0.0
        %399 = vmatpush1.msra.mxu0 0.0
        %400 = vmatprep.subr.mxu0 0.0
        %401 = vmatpush1.msra.mxu0 0.0
        %402 = vmatprep.subr.mxu0 0.0
        %403 = vmatpush1.msra.mxu0 0.0
        %404 = vmatprep.subr.mxu0 0.0
        %405 = vmatpush1.msra.mxu0 0.0
        %406 = vmatprep.subr.mxu0 0.0
        %407 = vmatpush1.msra.mxu0 %v257
        %408 = vmatprep.subr.mxu0 0.0
        %409 = vmatpush1.msra.mxu0 %v256
        %410 = vmatprep.subr.mxu0 0.0
        %411 = vmatpush1.msra.mxu0 %v255
        %412 = vmatprep.subr.mxu0 0.0
        %413 = vmatpush1.msra.mxu0 %v254
        %414 = vmatprep.subr.mxu0 0.0
        %415 = vmatpush1.msra.mxu0 %v253
        %416 = vmatprep.subr.mxu0 0.0
        %417 = vmatpush1.msra.mxu0 %v252
        %418 = vmatprep.subr.mxu0 0.0
        %419 = vmatpush1.msra.mxu0 %v251
        %420 = vmatprep.subr.mxu0 0.0
        %421 = vmatpush1.msra.mxu0 %v250
        %422 = vmatprep.subr.mxu0 0.0
        %423 = vmatpush2.msra.mxu0 0.0
        %424 = vmatprep.subr.mxu0 0.0
        %425 = vmatpush2.msra.mxu0 0.0
        %426 = vmatprep.subr.mxu0 0.0
        %427 = vmatpush2.msra.mxu0 0.0
        %428 = vmatprep.subr.mxu0 0.0
        %429 = vmatpush2.msra.mxu0 0.0
        %430 = vmatprep.subr.mxu0 0.0
        %431 = vmatpush2.msra.mxu0 0.0
        %432 = vmatprep.subr.mxu0 0.0
        %433 = vmatpush2.msra.mxu0 0.0
        %434 = vmatprep.subr.mxu0 0.0
        %435 = vmatpush2.msra.mxu0 0.0
        %436 = vmatprep.subr.mxu0 0.0
        %437 = vmatpush2.msra.mxu0 0.0
        %438 = vmatprep.subr.mxu0 0.0
        %439 = vmatpush2.msra.mxu0 0.0
        %440 = vmatprep.subr.mxu0 0.0
        %441 = vmatpush2.msra.mxu0 0.0
        %442 = vmatprep.subr.mxu0 0.0
        %443 = vmatpush2.msra.mxu0 0.0
        %444 = vmatprep.subr.mxu0 0.0
        %445 = vmatpush2.msra.mxu0 0.0
        %446 = vmatprep.subr.mxu0 0.0
        %447 = vmatpush2.msra.mxu0 0.0
        %448 = vmatprep.subr.mxu0 0.0
        %449 = vmatpush2.msra.mxu0 0.0
        %450 = vmatprep.subr.mxu0 0.0
        %451 = vmatpush2.msra.mxu0 0.0
        %452 = vmatprep.subr.mxu0 0.0
        %453 = vmatpush2.msra.mxu0 0.0
        %454 = vmatprep.mubr.f32.mxu0 0.0
        %455 = vmatmul.mubr.f32.gmra.mxu0 %v388
        %v456 = vpop.f32.mrf.mxu0
        %v457 = vadd.f32 0.0, %v456
        %v458 = vpop.f32.mrf.mxu0
        %459 = vdwg.mxu0
        %v460 = vsub.f32 %v241, %v457
        %v461 = vmul.f32 %v460, %v460
        %v462 = vsel %vm259, %v461, 0.0
        %463 = vadd.xlane.f32.xlu0 %v462
        %v464 = vpop.xlane.xlu0 %463
        %v465 = vadd.f32 %v464, 0.0
        %s466 = scalar_lea.vmem %s1, 64
        %v467 = vld [vmem:[%s466] sm:$0xff]
        %v468 = vld [vmem:[%s466 + $0x8] sm:$0xff]
        %v469 = vld [vmem:[%s466 + $0x10] sm:$0xff]
        %v470 = vld [vmem:[%s466 + $0x18] sm:$0xff]
        %v471 = vld [vmem:[%s466 + $0x20] sm:$0xff]
        %v472 = vld [vmem:[%s466 + $0x28] sm:$0xff]
        %v473 = vld [vmem:[%s466 + $0x30] sm:$0xff]
        %v474 = vld [vmem:[%s466 + $0x38] sm:$0xff]
        %v475 = vld [vmem:[%s2 + $0x1] sm:$0x1]
        %v477 = vsel %vm259, %v460, 0
        %v480 = vsel %vm259, %v467, 0
        %v483 = vsel %vm259, %v468, 0
        %v486 = vsel %vm259, %v469, 0
        %v489 = vsel %vm259, %v470, 0
        %v492 = vsel %vm259, %v471, 0
        %v495 = vsel %vm259, %v472, 0
        %v498 = vsel %vm259, %v473, 0
        %v501 = vsel %vm259, %v474, 0
        %503 = vmatprep.subr.mxu0 0.0
        %504 = vmatpush1.xpose.msra.mxu0 0.0
        %505 = vmatprep.subr.mxu0 0.0
        %506 = vmatpush1.xpose.msra.mxu0 0.0
        %507 = vmatprep.subr.mxu0 0.0
        %508 = vmatpush1.xpose.msra.mxu0 0.0
        %509 = vmatprep.subr.mxu0 0.0
        %510 = vmatpush1.xpose.msra.mxu0 0.0
        %511 = vmatprep.subr.mxu0 0.0
        %512 = vmatpush1.xpose.msra.mxu0 0.0
        %513 = vmatprep.subr.mxu0 0.0
        %514 = vmatpush1.xpose.msra.mxu0 0.0
        %515 = vmatprep.subr.mxu0 0.0
        %516 = vmatpush1.xpose.msra.mxu0 0.0
        %517 = vmatprep.subr.mxu0 0.0
        %518 = vmatpush1.xpose.msra.mxu0 0.0
        %519 = vmatprep.subr.mxu0 0.0
        %520 = vmatpush1.xpose.msra.mxu0 %v501
        %521 = vmatprep.subr.mxu0 0.0
        %522 = vmatpush1.xpose.msra.mxu0 %v498
        %523 = vmatprep.subr.mxu0 0.0
        %524 = vmatpush1.xpose.msra.mxu0 %v495
        %525 = vmatprep.subr.mxu0 0.0
        %526 = vmatpush1.xpose.msra.mxu0 %v492
        %527 = vmatprep.subr.mxu0 0.0
        %528 = vmatpush1.xpose.msra.mxu0 %v489
        %529 = vmatprep.subr.mxu0 0.0
        %530 = vmatpush1.xpose.msra.mxu0 %v486
        %531 = vmatprep.subr.mxu0 0.0
        %532 = vmatpush1.xpose.msra.mxu0 %v483
        %533 = vmatprep.subr.mxu0 0.0
        %534 = vmatpush1.xpose.msra.mxu0 %v480
        %535 = vmatprep.subr.mxu0 0.0
        %536 = vmatpush2.xpose.msra.mxu0 0.0
        %537 = vmatprep.subr.mxu0 0.0
        %538 = vmatpush2.xpose.msra.mxu0 0.0
        %539 = vmatprep.subr.mxu0 0.0
        %540 = vmatpush2.xpose.msra.mxu0 0.0
        %541 = vmatprep.subr.mxu0 0.0
        %542 = vmatpush2.xpose.msra.mxu0 0.0
        %543 = vmatprep.subr.mxu0 0.0
        %544 = vmatpush2.xpose.msra.mxu0 0.0
        %545 = vmatprep.subr.mxu0 0.0
        %546 = vmatpush2.xpose.msra.mxu0 0.0
        %547 = vmatprep.subr.mxu0 0.0
        %548 = vmatpush2.xpose.msra.mxu0 0.0
        %549 = vmatprep.subr.mxu0 0.0
        %550 = vmatpush2.xpose.msra.mxu0 0.0
        %551 = vmatprep.subr.mxu0 0.0
        %552 = vmatpush2.xpose.msra.mxu0 0.0
        %553 = vmatprep.subr.mxu0 0.0
        %554 = vmatpush2.xpose.msra.mxu0 0.0
        %555 = vmatprep.subr.mxu0 0.0
        %556 = vmatpush2.xpose.msra.mxu0 0.0
        %557 = vmatprep.subr.mxu0 0.0
        %558 = vmatpush2.xpose.msra.mxu0 0.0
        %559 = vmatprep.subr.mxu0 0.0
        %560 = vmatpush2.xpose.msra.mxu0 0.0
        %561 = vmatprep.subr.mxu0 0.0
        %562 = vmatpush2.xpose.msra.mxu0 0.0
        %563 = vmatprep.subr.mxu0 0.0
        %564 = vmatpush2.xpose.msra.mxu0 0.0
        %565 = vmatprep.subr.mxu0 0.0
        %566 = vmatpush2.xpose.msra.mxu0 0.0
        %567 = vmatprep.mubr.f32.mxu0 0.0
        %568 = vmatmul.mubr.f32.gmra.mxu0 %v477
        %v569 = vpop.f32.mrf.mxu0
        %v570 = vadd.f32 0.0, %v569
        %v571 = vpop.f32.mrf.mxu0
        %572 = vdwg.mxu0
        %v573 = vmul.f32 %v570, 2.0
        %v574 = vlaneseq
        %v575 = vshrl.u32 %v574, 7
        %v576 = vsub.s32 0, %v575
        %v577 = vrot.slane %v475, %v576
        %v578 = vsub.f32 %v577, %v573
        %v579 = vsel %vm363, %v578, inf
        %580 = vmin.xlane.f32.xlu0 %v579
        %v581 = vpop.xlane.xlu0 %580
        %vm582 = vcmp.le.f32.partialorder %v578, %v581
        %v583 = vsel %vm582, %v249, 64
        %v584 = vsel %vm363, %v583, 2147483647
        %v585 = vand.u32 %v584, 65535
        %v586 = vshra.s32 %v584, 16
        %v587 = vcvt.s32.f32 %v585
        %v588 = vcvt.s32.f32 %v586
        %589 = vmin.xlane.f32.xlu0 %v588
        %v590 = vpop.xlane.xlu0 %589
        %vm591 = vcmp.eq.f32.partialorder %v588, %v590
        %v592 = vsel %vm591, %v587, inf
        %593 = vmin.xlane.f32.xlu0 %v592
        %v594 = vpop.xlane.xlu0 %593
        %v595 = vcvt.f32.s32 %v594
        %v596 = vcvt.f32.s32 %v590
        %v597 = vshll.u32 %v596, 16
        %v598 = vadd.s32 %v597, %v595
        %vm599 = vcmp.eq.s32.totalorder %v249, %v598
        %v600 = vsel %vm599, 1, 0
        %v601 = vcvt.s32.f32 %v600
        %v603 = vsel %vm363, %v601, 0
        %605 = vmatprep.subr.mxu0 0.0
        %606 = vmatpush1.msra.mxu0 0.0
        %607 = vmatprep.subr.mxu0 0.0
        %608 = vmatpush1.msra.mxu0 0.0
        %609 = vmatprep.subr.mxu0 0.0
        %610 = vmatpush1.msra.mxu0 0.0
        %611 = vmatprep.subr.mxu0 0.0
        %612 = vmatpush1.msra.mxu0 0.0
        %613 = vmatprep.subr.mxu0 0.0
        %614 = vmatpush1.msra.mxu0 0.0
        %615 = vmatprep.subr.mxu0 0.0
        %616 = vmatpush1.msra.mxu0 0.0
        %617 = vmatprep.subr.mxu0 0.0
        %618 = vmatpush1.msra.mxu0 0.0
        %619 = vmatprep.subr.mxu0 0.0
        %620 = vmatpush1.msra.mxu0 0.0
        %621 = vmatprep.subr.mxu0 0.0
        %622 = vmatpush1.msra.mxu0 %v474
        %623 = vmatprep.subr.mxu0 0.0
        %624 = vmatpush1.msra.mxu0 %v473
        %625 = vmatprep.subr.mxu0 0.0
        %626 = vmatpush1.msra.mxu0 %v472
        %627 = vmatprep.subr.mxu0 0.0
        %628 = vmatpush1.msra.mxu0 %v471
        %629 = vmatprep.subr.mxu0 0.0
        %630 = vmatpush1.msra.mxu0 %v470
        %631 = vmatprep.subr.mxu0 0.0
        %632 = vmatpush1.msra.mxu0 %v469
        %633 = vmatprep.subr.mxu0 0.0
        %634 = vmatpush1.msra.mxu0 %v468
        %635 = vmatprep.subr.mxu0 0.0
        %636 = vmatpush1.msra.mxu0 %v467
        %637 = vmatprep.subr.mxu0 0.0
        %638 = vmatpush2.msra.mxu0 0.0
        %639 = vmatprep.subr.mxu0 0.0
        %640 = vmatpush2.msra.mxu0 0.0
        %641 = vmatprep.subr.mxu0 0.0
        %642 = vmatpush2.msra.mxu0 0.0
        %643 = vmatprep.subr.mxu0 0.0
        %644 = vmatpush2.msra.mxu0 0.0
        %645 = vmatprep.subr.mxu0 0.0
        %646 = vmatpush2.msra.mxu0 0.0
        %647 = vmatprep.subr.mxu0 0.0
        %648 = vmatpush2.msra.mxu0 0.0
        %649 = vmatprep.subr.mxu0 0.0
        %650 = vmatpush2.msra.mxu0 0.0
        %651 = vmatprep.subr.mxu0 0.0
        %652 = vmatpush2.msra.mxu0 0.0
        %653 = vmatprep.subr.mxu0 0.0
        %654 = vmatpush2.msra.mxu0 0.0
        %655 = vmatprep.subr.mxu0 0.0
        %656 = vmatpush2.msra.mxu0 0.0
        %657 = vmatprep.subr.mxu0 0.0
        %658 = vmatpush2.msra.mxu0 0.0
        %659 = vmatprep.subr.mxu0 0.0
        %660 = vmatpush2.msra.mxu0 0.0
        %661 = vmatprep.subr.mxu0 0.0
        %662 = vmatpush2.msra.mxu0 0.0
        %663 = vmatprep.subr.mxu0 0.0
        %664 = vmatpush2.msra.mxu0 0.0
        %665 = vmatprep.subr.mxu0 0.0
        %666 = vmatpush2.msra.mxu0 0.0
        %667 = vmatprep.subr.mxu0 0.0
        %668 = vmatpush2.msra.mxu0 0.0
        %669 = vmatprep.mubr.f32.mxu0 0.0
        %670 = vmatmul.mubr.f32.gmra.mxu0 %v603
        %v671 = vpop.f32.mrf.mxu0
        %v672 = vadd.f32 0.0, %v671
        %v673 = vpop.f32.mrf.mxu0
        %674 = vdwg.mxu0
        %v675 = vsub.f32 %v460, %v672
        %v676 = vmul.f32 %v675, %v675
        %v677 = vsel %vm259, %v676, 0.0
        %678 = vadd.xlane.f32.xlu0 %v677
        %v679 = vpop.xlane.xlu0 %678
        %v680 = vadd.f32 %v465, %v679
        %s681 = scalar_lea.vmem %s1, 128
        %v682 = vld [vmem:[%s681] sm:$0xff]
        %v683 = vld [vmem:[%s681 + $0x8] sm:$0xff]
        %v684 = vld [vmem:[%s681 + $0x10] sm:$0xff]
        %v685 = vld [vmem:[%s681 + $0x18] sm:$0xff]
        %v686 = vld [vmem:[%s681 + $0x20] sm:$0xff]
        %v687 = vld [vmem:[%s681 + $0x28] sm:$0xff]
        %v688 = vld [vmem:[%s681 + $0x30] sm:$0xff]
        %v689 = vld [vmem:[%s681 + $0x38] sm:$0xff]
        %v690 = vld [vmem:[%s2 + $0x2] sm:$0x1]
        %v692 = vsel %vm259, %v675, 0
        %v695 = vsel %vm259, %v682, 0
        %v698 = vsel %vm259, %v683, 0
        %v701 = vsel %vm259, %v684, 0
        %v704 = vsel %vm259, %v685, 0
        %v707 = vsel %vm259, %v686, 0
        %v710 = vsel %vm259, %v687, 0
        %v713 = vsel %vm259, %v688, 0
        %v716 = vsel %vm259, %v689, 0
        %718 = vmatprep.subr.mxu0 0.0
        %719 = vmatpush1.xpose.msra.mxu0 0.0
        %720 = vmatprep.subr.mxu0 0.0
        %721 = vmatpush1.xpose.msra.mxu0 0.0
        %722 = vmatprep.subr.mxu0 0.0
        %723 = vmatpush1.xpose.msra.mxu0 0.0
        %724 = vmatprep.subr.mxu0 0.0
        %725 = vmatpush1.xpose.msra.mxu0 0.0
        %726 = vmatprep.subr.mxu0 0.0
        %727 = vmatpush1.xpose.msra.mxu0 0.0
        %728 = vmatprep.subr.mxu0 0.0
        %729 = vmatpush1.xpose.msra.mxu0 0.0
        %730 = vmatprep.subr.mxu0 0.0
        %731 = vmatpush1.xpose.msra.mxu0 0.0
        %732 = vmatprep.subr.mxu0 0.0
        %733 = vmatpush1.xpose.msra.mxu0 0.0
        %734 = vmatprep.subr.mxu0 0.0
        %735 = vmatpush1.xpose.msra.mxu0 %v716
        %736 = vmatprep.subr.mxu0 0.0
        %737 = vmatpush1.xpose.msra.mxu0 %v713
        %738 = vmatprep.subr.mxu0 0.0
        %739 = vmatpush1.xpose.msra.mxu0 %v710
        %740 = vmatprep.subr.mxu0 0.0
        %741 = vmatpush1.xpose.msra.mxu0 %v707
        %742 = vmatprep.subr.mxu0 0.0
        %743 = vmatpush1.xpose.msra.mxu0 %v704
        %744 = vmatprep.subr.mxu0 0.0
        %745 = vmatpush1.xpose.msra.mxu0 %v701
        %746 = vmatprep.subr.mxu0 0.0
        %747 = vmatpush1.xpose.msra.mxu0 %v698
        %748 = vmatprep.subr.mxu0 0.0
        %749 = vmatpush1.xpose.msra.mxu0 %v695
        %750 = vmatprep.subr.mxu0 0.0
        %751 = vmatpush2.xpose.msra.mxu0 0.0
        %752 = vmatprep.subr.mxu0 0.0
        %753 = vmatpush2.xpose.msra.mxu0 0.0
        %754 = vmatprep.subr.mxu0 0.0
        %755 = vmatpush2.xpose.msra.mxu0 0.0
        %756 = vmatprep.subr.mxu0 0.0
        %757 = vmatpush2.xpose.msra.mxu0 0.0
        %758 = vmatprep.subr.mxu0 0.0
        %759 = vmatpush2.xpose.msra.mxu0 0.0
        %760 = vmatprep.subr.mxu0 0.0
        %761 = vmatpush2.xpose.msra.mxu0 0.0
        %762 = vmatprep.subr.mxu0 0.0
        %763 = vmatpush2.xpose.msra.mxu0 0.0
        %764 = vmatprep.subr.mxu0 0.0
        %765 = vmatpush2.xpose.msra.mxu0 0.0
        %766 = vmatprep.subr.mxu0 0.0
        %767 = vmatpush2.xpose.msra.mxu0 0.0
        %768 = vmatprep.subr.mxu0 0.0
        %769 = vmatpush2.xpose.msra.mxu0 0.0
        %770 = vmatprep.subr.mxu0 0.0
        %771 = vmatpush2.xpose.msra.mxu0 0.0
        %772 = vmatprep.subr.mxu0 0.0
        %773 = vmatpush2.xpose.msra.mxu0 0.0
        %774 = vmatprep.subr.mxu0 0.0
        %775 = vmatpush2.xpose.msra.mxu0 0.0
        %776 = vmatprep.subr.mxu0 0.0
        %777 = vmatpush2.xpose.msra.mxu0 0.0
        %778 = vmatprep.subr.mxu0 0.0
        %779 = vmatpush2.xpose.msra.mxu0 0.0
        %780 = vmatprep.subr.mxu0 0.0
        %781 = vmatpush2.xpose.msra.mxu0 0.0
        %782 = vmatprep.mubr.f32.mxu0 0.0
        %783 = vmatmul.mubr.f32.gmra.mxu0 %v692
        %v784 = vpop.f32.mrf.mxu0
        %v785 = vadd.f32 0.0, %v784
        %v786 = vpop.f32.mrf.mxu0
        %787 = vdwg.mxu0
        %v788 = vmul.f32 %v785, 2.0
        %v789 = vlaneseq
        %v790 = vshrl.u32 %v789, 7
        %v791 = vsub.s32 0, %v790
        %v792 = vrot.slane %v690, %v791
        %v793 = vsub.f32 %v792, %v788
        %v794 = vsel %vm363, %v793, inf
        %795 = vmin.xlane.f32.xlu0 %v794
        %v796 = vpop.xlane.xlu0 %795
        %vm797 = vcmp.le.f32.partialorder %v793, %v796
        %v798 = vsel %vm797, %v249, 64
        %v799 = vsel %vm363, %v798, 2147483647
        %v800 = vand.u32 %v799, 65535
        %v801 = vshra.s32 %v799, 16
        %v802 = vcvt.s32.f32 %v800
        %v803 = vcvt.s32.f32 %v801
        %804 = vmin.xlane.f32.xlu0 %v803
        %v805 = vpop.xlane.xlu0 %804
        %vm806 = vcmp.eq.f32.partialorder %v803, %v805
        %v807 = vsel %vm806, %v802, inf
        %808 = vmin.xlane.f32.xlu0 %v807
        %v809 = vpop.xlane.xlu0 %808
        %v810 = vcvt.f32.s32 %v809
        %v811 = vcvt.f32.s32 %v805
        %v812 = vshll.u32 %v811, 16
        %v813 = vadd.s32 %v812, %v810
        %vm814 = vcmp.eq.s32.totalorder %v249, %v813
        %v815 = vsel %vm814, 1, 0
        %v816 = vcvt.s32.f32 %v815
        %v818 = vsel %vm363, %v816, 0
        %820 = vmatprep.subr.mxu0 0.0
        %821 = vmatpush1.msra.mxu0 0.0
        %822 = vmatprep.subr.mxu0 0.0
        %823 = vmatpush1.msra.mxu0 0.0
        %824 = vmatprep.subr.mxu0 0.0
        %825 = vmatpush1.msra.mxu0 0.0
        %826 = vmatprep.subr.mxu0 0.0
        %827 = vmatpush1.msra.mxu0 0.0
        %828 = vmatprep.subr.mxu0 0.0
        %829 = vmatpush1.msra.mxu0 0.0
        %830 = vmatprep.subr.mxu0 0.0
        %831 = vmatpush1.msra.mxu0 0.0
        %832 = vmatprep.subr.mxu0 0.0
        %833 = vmatpush1.msra.mxu0 0.0
        %834 = vmatprep.subr.mxu0 0.0
        %835 = vmatpush1.msra.mxu0 0.0
        %836 = vmatprep.subr.mxu0 0.0
        %837 = vmatpush1.msra.mxu0 %v689
        %838 = vmatprep.subr.mxu0 0.0
        %839 = vmatpush1.msra.mxu0 %v688
        %840 = vmatprep.subr.mxu0 0.0
        %841 = vmatpush1.msra.mxu0 %v687
        %842 = vmatprep.subr.mxu0 0.0
        %843 = vmatpush1.msra.mxu0 %v686
        %844 = vmatprep.subr.mxu0 0.0
        %845 = vmatpush1.msra.mxu0 %v685
        %846 = vmatprep.subr.mxu0 0.0
        %847 = vmatpush1.msra.mxu0 %v684
        %848 = vmatprep.subr.mxu0 0.0
        %849 = vmatpush1.msra.mxu0 %v683
        %850 = vmatprep.subr.mxu0 0.0
        %851 = vmatpush1.msra.mxu0 %v682
        %852 = vmatprep.subr.mxu0 0.0
        %853 = vmatpush2.msra.mxu0 0.0
        %854 = vmatprep.subr.mxu0 0.0
        %855 = vmatpush2.msra.mxu0 0.0
        %856 = vmatprep.subr.mxu0 0.0
        %857 = vmatpush2.msra.mxu0 0.0
        %858 = vmatprep.subr.mxu0 0.0
        %859 = vmatpush2.msra.mxu0 0.0
        %860 = vmatprep.subr.mxu0 0.0
        %861 = vmatpush2.msra.mxu0 0.0
        %862 = vmatprep.subr.mxu0 0.0
        %863 = vmatpush2.msra.mxu0 0.0
        %864 = vmatprep.subr.mxu0 0.0
        %865 = vmatpush2.msra.mxu0 0.0
        %866 = vmatprep.subr.mxu0 0.0
        %867 = vmatpush2.msra.mxu0 0.0
        %868 = vmatprep.subr.mxu0 0.0
        %869 = vmatpush2.msra.mxu0 0.0
        %870 = vmatprep.subr.mxu0 0.0
        %871 = vmatpush2.msra.mxu0 0.0
        %872 = vmatprep.subr.mxu0 0.0
        %873 = vmatpush2.msra.mxu0 0.0
        %874 = vmatprep.subr.mxu0 0.0
        %875 = vmatpush2.msra.mxu0 0.0
        %876 = vmatprep.subr.mxu0 0.0
        %877 = vmatpush2.msra.mxu0 0.0
        %878 = vmatprep.subr.mxu0 0.0
        %879 = vmatpush2.msra.mxu0 0.0
        %880 = vmatprep.subr.mxu0 0.0
        %881 = vmatpush2.msra.mxu0 0.0
        %882 = vmatprep.subr.mxu0 0.0
        %883 = vmatpush2.msra.mxu0 0.0
        %884 = vmatprep.mubr.f32.mxu0 0.0
        %885 = vmatmul.mubr.f32.gmra.mxu0 %v818
        %v886 = vpop.f32.mrf.mxu0
        %v887 = vadd.f32 0.0, %v886
        %v888 = vpop.f32.mrf.mxu0
        %889 = vdwg.mxu0
        %v890 = vsub.f32 %v675, %v887
        %v891 = vmul.f32 %v890, %v890
        %v892 = vsel %vm259, %v891, 0.0
        %893 = vadd.xlane.f32.xlu0 %v892
        %v894 = vpop.xlane.xlu0 %893
        %v895 = vadd.f32 %v680, %v894
        %s896 = scalar_lea.vmem %s1, 192
        %v897 = vld [vmem:[%s896] sm:$0xff]
        %v898 = vld [vmem:[%s896 + $0x8] sm:$0xff]
        %v899 = vld [vmem:[%s896 + $0x10] sm:$0xff]
        %v900 = vld [vmem:[%s896 + $0x18] sm:$0xff]
        %v901 = vld [vmem:[%s896 + $0x20] sm:$0xff]
        %v902 = vld [vmem:[%s896 + $0x28] sm:$0xff]
        %v903 = vld [vmem:[%s896 + $0x30] sm:$0xff]
        %v904 = vld [vmem:[%s896 + $0x38] sm:$0xff]
        %v905 = vld [vmem:[%s2 + $0x3] sm:$0x1]
        %v907 = vsel %vm259, %v890, 0
        %v910 = vsel %vm259, %v897, 0
        %v913 = vsel %vm259, %v898, 0
        %v916 = vsel %vm259, %v899, 0
        %v919 = vsel %vm259, %v900, 0
        %v922 = vsel %vm259, %v901, 0
        %v925 = vsel %vm259, %v902, 0
        %v928 = vsel %vm259, %v903, 0
        %v931 = vsel %vm259, %v904, 0
        %933 = vmatprep.subr.mxu0 0.0
        %934 = vmatpush1.xpose.msra.mxu0 0.0
        %935 = vmatprep.subr.mxu0 0.0
        %936 = vmatpush1.xpose.msra.mxu0 0.0
        %937 = vmatprep.subr.mxu0 0.0
        %938 = vmatpush1.xpose.msra.mxu0 0.0
        %939 = vmatprep.subr.mxu0 0.0
        %940 = vmatpush1.xpose.msra.mxu0 0.0
        %941 = vmatprep.subr.mxu0 0.0
        %942 = vmatpush1.xpose.msra.mxu0 0.0
        %943 = vmatprep.subr.mxu0 0.0
        %944 = vmatpush1.xpose.msra.mxu0 0.0
        %945 = vmatprep.subr.mxu0 0.0
        %946 = vmatpush1.xpose.msra.mxu0 0.0
        %947 = vmatprep.subr.mxu0 0.0
        %948 = vmatpush1.xpose.msra.mxu0 0.0
        %949 = vmatprep.subr.mxu0 0.0
        %950 = vmatpush1.xpose.msra.mxu0 %v931
        %951 = vmatprep.subr.mxu0 0.0
        %952 = vmatpush1.xpose.msra.mxu0 %v928
        %953 = vmatprep.subr.mxu0 0.0
        %954 = vmatpush1.xpose.msra.mxu0 %v925
        %955 = vmatprep.subr.mxu0 0.0
        %956 = vmatpush1.xpose.msra.mxu0 %v922
        %957 = vmatprep.subr.mxu0 0.0
        %958 = vmatpush1.xpose.msra.mxu0 %v919
        %959 = vmatprep.subr.mxu0 0.0
        %960 = vmatpush1.xpose.msra.mxu0 %v916
        %961 = vmatprep.subr.mxu0 0.0
        %962 = vmatpush1.xpose.msra.mxu0 %v913
        %963 = vmatprep.subr.mxu0 0.0
        %964 = vmatpush1.xpose.msra.mxu0 %v910
        %965 = vmatprep.subr.mxu0 0.0
        %966 = vmatpush2.xpose.msra.mxu0 0.0
        %967 = vmatprep.subr.mxu0 0.0
        %968 = vmatpush2.xpose.msra.mxu0 0.0
        %969 = vmatprep.subr.mxu0 0.0
        %970 = vmatpush2.xpose.msra.mxu0 0.0
        %971 = vmatprep.subr.mxu0 0.0
        %972 = vmatpush2.xpose.msra.mxu0 0.0
        %973 = vmatprep.subr.mxu0 0.0
        %974 = vmatpush2.xpose.msra.mxu0 0.0
        %975 = vmatprep.subr.mxu0 0.0
        %976 = vmatpush2.xpose.msra.mxu0 0.0
        %977 = vmatprep.subr.mxu0 0.0
        %978 = vmatpush2.xpose.msra.mxu0 0.0
        %979 = vmatprep.subr.mxu0 0.0
        %980 = vmatpush2.xpose.msra.mxu0 0.0
        %981 = vmatprep.subr.mxu0 0.0
        %982 = vmatpush2.xpose.msra.mxu0 0.0
        %983 = vmatprep.subr.mxu0 0.0
        %984 = vmatpush2.xpose.msra.mxu0 0.0
        %985 = vmatprep.subr.mxu0 0.0
        %986 = vmatpush2.xpose.msra.mxu0 0.0
        %987 = vmatprep.subr.mxu0 0.0
        %988 = vmatpush2.xpose.msra.mxu0 0.0
        %989 = vmatprep.subr.mxu0 0.0
        %990 = vmatpush2.xpose.msra.mxu0 0.0
        %991 = vmatprep.subr.mxu0 0.0
        %992 = vmatpush2.xpose.msra.mxu0 0.0
        %993 = vmatprep.subr.mxu0 0.0
        %994 = vmatpush2.xpose.msra.mxu0 0.0
        %995 = vmatprep.subr.mxu0 0.0
        %996 = vmatpush2.xpose.msra.mxu0 0.0
        %997 = vmatprep.mubr.f32.mxu0 0.0
        %998 = vmatmul.mubr.f32.gmra.mxu0 %v907
        %v999 = vpop.f32.mrf.mxu0
        %v1000 = vadd.f32 0.0, %v999
        %v1001 = vpop.f32.mrf.mxu0
        %1002 = vdwg.mxu0
        %v1003 = vmul.f32 %v1000, 2.0
        %v1004 = vlaneseq
        %v1005 = vshrl.u32 %v1004, 7
        %v1006 = vsub.s32 0, %v1005
        %v1007 = vrot.slane %v905, %v1006
        %v1008 = vsub.f32 %v1007, %v1003
        %v1009 = vsel %vm363, %v1008, inf
        %1010 = vmin.xlane.f32.xlu0 %v1009
        %v1011 = vpop.xlane.xlu0 %1010
        %vm1012 = vcmp.le.f32.partialorder %v1008, %v1011
        %v1013 = vsel %vm1012, %v249, 64
        %v1014 = vsel %vm363, %v1013, 2147483647
        %v1015 = vand.u32 %v1014, 65535
        %v1016 = vshra.s32 %v1014, 16
        %v1017 = vcvt.s32.f32 %v1015
        %v1018 = vcvt.s32.f32 %v1016
        %1019 = vmin.xlane.f32.xlu0 %v1018
        %v1020 = vpop.xlane.xlu0 %1019
        %vm1021 = vcmp.eq.f32.partialorder %v1018, %v1020
        %v1022 = vsel %vm1021, %v1017, inf
        %1023 = vmin.xlane.f32.xlu0 %v1022
        %v1024 = vpop.xlane.xlu0 %1023
        %v1025 = vcvt.f32.s32 %v1024
        %v1026 = vcvt.f32.s32 %v1020
        %v1027 = vshll.u32 %v1026, 16
        %v1028 = vadd.s32 %v1027, %v1025
        %vm1029 = vcmp.eq.s32.totalorder %v249, %v1028
        %v1030 = vsel %vm1029, 1, 0
        %v1031 = vcvt.s32.f32 %v1030
        %v1033 = vsel %vm363, %v1031, 0
        %1035 = vmatprep.subr.mxu0 0.0
        %1036 = vmatpush1.msra.mxu0 0.0
        %1037 = vmatprep.subr.mxu0 0.0
        %1038 = vmatpush1.msra.mxu0 0.0
        %1039 = vmatprep.subr.mxu0 0.0
        %1040 = vmatpush1.msra.mxu0 0.0
        %1041 = vmatprep.subr.mxu0 0.0
        %1042 = vmatpush1.msra.mxu0 0.0
        %1043 = vmatprep.subr.mxu0 0.0
        %1044 = vmatpush1.msra.mxu0 0.0
        %1045 = vmatprep.subr.mxu0 0.0
        %1046 = vmatpush1.msra.mxu0 0.0
        %1047 = vmatprep.subr.mxu0 0.0
        %1048 = vmatpush1.msra.mxu0 0.0
        %1049 = vmatprep.subr.mxu0 0.0
        %1050 = vmatpush1.msra.mxu0 0.0
        %1051 = vmatprep.subr.mxu0 0.0
        %1052 = vmatpush1.msra.mxu0 %v904
        %1053 = vmatprep.subr.mxu0 0.0
        %1054 = vmatpush1.msra.mxu0 %v903
        %1055 = vmatprep.subr.mxu0 0.0
        %1056 = vmatpush1.msra.mxu0 %v902
        %1057 = vmatprep.subr.mxu0 0.0
        %1058 = vmatpush1.msra.mxu0 %v901
        %1059 = vmatprep.subr.mxu0 0.0
        %1060 = vmatpush1.msra.mxu0 %v900
        %1061 = vmatprep.subr.mxu0 0.0
        %1062 = vmatpush1.msra.mxu0 %v899
        %1063 = vmatprep.subr.mxu0 0.0
        %1064 = vmatpush1.msra.mxu0 %v898
        %1065 = vmatprep.subr.mxu0 0.0
        %1066 = vmatpush1.msra.mxu0 %v897
        %1067 = vmatprep.subr.mxu0 0.0
        %1068 = vmatpush2.msra.mxu0 0.0
        %1069 = vmatprep.subr.mxu0 0.0
        %1070 = vmatpush2.msra.mxu0 0.0
        %1071 = vmatprep.subr.mxu0 0.0
        %1072 = vmatpush2.msra.mxu0 0.0
        %1073 = vmatprep.subr.mxu0 0.0
        %1074 = vmatpush2.msra.mxu0 0.0
        %1075 = vmatprep.subr.mxu0 0.0
        %1076 = vmatpush2.msra.mxu0 0.0
        %1077 = vmatprep.subr.mxu0 0.0
        %1078 = vmatpush2.msra.mxu0 0.0
        %1079 = vmatprep.subr.mxu0 0.0
        %1080 = vmatpush2.msra.mxu0 0.0
        %1081 = vmatprep.subr.mxu0 0.0
        %1082 = vmatpush2.msra.mxu0 0.0
        %1083 = vmatprep.subr.mxu0 0.0
        %1084 = vmatpush2.msra.mxu0 0.0
        %1085 = vmatprep.subr.mxu0 0.0
        %1086 = vmatpush2.msra.mxu0 0.0
        %1087 = vmatprep.subr.mxu0 0.0
        %1088 = vmatpush2.msra.mxu0 0.0
        %1089 = vmatprep.subr.mxu0 0.0
        %1090 = vmatpush2.msra.mxu0 0.0
        %1091 = vmatprep.subr.mxu0 0.0
        %1092 = vmatpush2.msra.mxu0 0.0
        %1093 = vmatprep.subr.mxu0 0.0
        %1094 = vmatpush2.msra.mxu0 0.0
        %1095 = vmatprep.subr.mxu0 0.0
        %1096 = vmatpush2.msra.mxu0 0.0
        %1097 = vmatprep.subr.mxu0 0.0
        %1098 = vmatpush2.msra.mxu0 0.0
        %1099 = vmatprep.mubr.f32.mxu0 0.0
        %1100 = vmatmul.mubr.f32.gmra.mxu0 %v1033
        %v1101 = vpop.f32.mrf.mxu0
        %v1102 = vadd.f32 0.0, %v1101
        %v1103 = vpop.f32.mrf.mxu0
        %1104 = vdwg.mxu0
        %v1105 = vsub.f32 %v890, %v1102
        %v1106 = vmul.f32 %v1105, %v1105
        %v1107 = vsel %vm259, %v1106, 0.0
        %1108 = vadd.xlane.f32.xlu0 %v1107
        %v1109 = vpop.xlane.xlu0 %1108
        %v1110 = vadd.f32 %v895, %v1109
        %v1111 = vsub.f32 %v241, %v1105
        %1112 = vst.msk [vmem:[%s219] sm:$0xff] %vm259, %v1111
        %vm1113 = vcmask 7168
        %v1114 = vsel %vm1113, %v383, %v598
        %vm1115 = vcmask 15360
        %v1116 = vsel %vm1115, %v1114, %v813
        %vm1117 = vcmask 23552
        %v1118 = vsel %vm1117, %v1116, %v1028
        %vm1119 = vcmask 31744
        %1120 = vst.msk [vmem:[%s240] sm:$0xff] %vm1119, %v1118
        %v1121 = vsel %vm247, %v1110, 0.0
        %v1122 = vsel %vm1113, %v1121, 0.0
        %1123 = vadd.xlane.f32.xlu0 %v1122
        %v1124 = vpop.xlane.xlu0 %1123
        %v1125 = vrot.slane %v1124, 4
        %v1126 = vadd.f32 %v1124, %v1125
        %v1127 = vrot.slane %v1126, 2
        %v1128 = vadd.f32 %v1126, %v1127
        %v1129 = vrot.slane %v1128, 1
        %v1130 = vadd.f32 %v1128, %v1129
        %s1131 = vtos %v1130
        %v1132 = vstv %s1131
        %1133 = vst [vmem:[%s232] sm:$0xff] %v1132
        %s1134 = sand.u32 %s99, 1
        %s1135 = scalar_lea.sflag [#allocation3], %s1134
        %s1136 = sand.u32 %s99, 1
        %s1137 = smul.addr %s1136, 8
        %s1138 = scalar_lea.vmem [#allocation2], %s1137
        %p1139 = scmp.lt.s32.totalorder %s23, 1
        %s1140 = scalar_select %p1139, %s23, 1
        %s1141 = smul.addr %s1140, 8
        %s1142 = scalar_lea.vmem %s4, %s1141
        %s1143 = sand.u32 %s151, 1
        %s1144 = scalar_lea.sflag [#allocation5], %s1143
        %s1145 = sand.u32 %s151, 1
        %s1146 = smul.addr %s1145, 8
        %s1147 = scalar_lea.vmem [#allocation4], %s1146
        // Predicated region
        $region33: #{tpu_custom_call.1} parent=31 // pred_check
          %p1148 = pneg %p109
        $region34: #{tpu_custom_call.1} parent=31 // pred_check_branch
          %1150 = sbr.rel (%p1148) target = $region36
        $region35: #{tpu_custom_call.1} parent=31 // pred_region
          %s1152 = ssub.s32 128, 128
          %1153 = vsyncadd %s1135, %s1152
          %s1154 = smul.addr %s23, 128
          %s1155 = scalar_lea.hbm %s3, %s1154
          %s1157 = sshll.u32 %s1138, 4
          %s1158 = int_to_ptr.vmem [resolvable:$true] %s1157
          %1160 = dma.vmem_to_hbm [thread:$0]  %s1158, 128, %s1155, %s1135
        $region36: #{tpu_custom_call.1} parent=31 // pred_fallthru
          _
        // Predicated region
        $region37: #{tpu_custom_call.1} parent=31 // pred_check
          %p1161 = pneg %p135
        $region38: #{tpu_custom_call.1} parent=31 // pred_check_branch
          %1163 = sbr.rel (%p1161) target = $region40
        $region39: #{tpu_custom_call.1} parent=31 // pred_region
          _
        $region40: #{tpu_custom_call.1} parent=31 // pred_fallthru
          _
        // Predicated region
        $region41: #{tpu_custom_call.1} parent=31 // pred_check
          %p1164 = pneg %p161
        $region42: #{tpu_custom_call.1} parent=31 // pred_check_branch
          %1166 = sbr.rel (%p1164) target = $region44
        $region43: #{tpu_custom_call.1} parent=31 // pred_region
          %s1168 = ssub.s32 128, 128
          %1169 = vsyncadd %s1144, %s1168
          %s1170 = smul.addr %s23, 128
          %s1171 = scalar_lea.hbm %s5, %s1170
          %s1173 = sshll.u32 %s1147, 4
          %s1174 = int_to_ptr.vmem [resolvable:$true] %s1173
          %1176 = dma.vmem_to_hbm [thread:$0]  %s1174, 128, %s1171, %s1144
        $region44: #{tpu_custom_call.1} parent=31 // pred_fallthru
          _
      $region32: #{tpu_custom_call.1} parent=5 // pred_fallthru
        _
      %p1177 = scmp.le.s32.totalorder 2, %s18
      // Predicated region
      $region45: #{tpu_custom_call.1} parent=5 // pred_check
        %p1178 = pneg %p1177
      $region46: #{tpu_custom_call.1} parent=5 // pred_check_branch
        %1180 = sbr.rel (%p1178) target = $region48
      $region47: #{tpu_custom_call.1} parent=5 // pred_region
        %s1181 = ssub.s32 %s18, 2
        // Predicated region
        $region49: #{tpu_custom_call.1} parent=47 // pred_check
          %p1182 = pneg %p115
        $region50: #{tpu_custom_call.1} parent=47 // pred_check_branch
          %1184 = sbr.rel (%p1182) target = $region52
        $region51: #{tpu_custom_call.1} parent=47 // pred_region
          %s1185 = sand.u32 %s100, 1
          %s1186 = scalar_lea.sflag [#allocation3], %s1185
          %s1187 = sand.u32 %s100, 1
          %s1188 = smul.addr %s1187, 8
          %s1189 = scalar_lea.vmem [#allocation2], %s1188
          %1190 = dma.done %s1186, 128
        $region52: #{tpu_custom_call.1} parent=47 // pred_fallthru
          _
        // Predicated region
        $region53: #{tpu_custom_call.1} parent=47 // pred_check
          %p1191 = pneg %p141
        $region54: #{tpu_custom_call.1} parent=47 // pred_check_branch
          %1193 = sbr.rel (%p1191) target = $region56
        $region55: #{tpu_custom_call.1} parent=47 // pred_region
          %p1194 = scmp.lt.s32.totalorder %s24, 1
          %s1195 = scalar_select %p1194, %s24, 1
          %s1196 = smul.addr %s1195, 8
          %s1197 = scalar_lea.vmem %s4, %s1196
        $region56: #{tpu_custom_call.1} parent=47 // pred_fallthru
          _
        // Predicated region
        $region57: #{tpu_custom_call.1} parent=47 // pred_check
          %p1198 = pneg %p167
        $region58: #{tpu_custom_call.1} parent=47 // pred_check_branch
          %1200 = sbr.rel (%p1198) target = $region60
        $region59: #{tpu_custom_call.1} parent=47 // pred_region
          %s1201 = sand.u32 %s152, 1
          %s1202 = scalar_lea.sflag [#allocation5], %s1201
          %s1203 = sand.u32 %s152, 1
          %s1204 = smul.addr %s1203, 8
          %s1205 = scalar_lea.vmem [#allocation4], %s1204
          %1206 = dma.done %s1202, 128
        $region60: #{tpu_custom_call.1} parent=47 // pred_fallthru
          _
      $region48: #{tpu_custom_call.1} parent=5 // pred_fallthru
        _
    $region6: #{tpu_custom_call.1} parent=1 // loop_footer
      %s22 = sadd.s32 1, %s18
    $region7: #{tpu_custom_call.1} parent=1 // loop_footer_branch
      %17 = sbr.rel target = $region3
    $region8: #{tpu_custom_call.1} parent=1 // loop_exit
      _
    %1207 = vsyncpa [#allocation3], 1
    %s1208 = scalar_lea.sflag [#allocation3], 1
    %1209 = vsyncpa %s1208, 1
    %1210 = vsyncpa [#allocation5], 1
    %s1211 = scalar_lea.sflag [#allocation5], 1
    %1212 = vsyncpa %s1211, 1

</llo_original>
